<compile_context>
chip_gen: v7x
topology: tpu7x:2x2x1
jax: 0.10.0
libtpu: 0.0.40
codegen_flags: <defaults>
</compile_context>

<pallas_src>
import functools
import numpy as np

import jax
import jax.numpy as jnp
from jax import lax
from jax.experimental import pallas as pl
from jax.experimental.pallas import tpu as pltpu


# ----------------------- configuration (mirrors the Wavenet cfg) -------------
class Cfg:
    n_audio_chans = 1
    n_classes = 8
    n_chans = 32          # residual channel width
    n_chans_res = 16      # gated channel width (conv emits 2x this)
    n_chans_skip = 32
    n_chans_end = 32
    kernel_size = 2
    n_layers = 3          # dilations 1, 2, 4
    dilation_stacks = 1
    embed_inputs = False
    batch_norm = False
    mixed_precision = False

    def n_input_chans(self):
        return self.n_audio_chans

    def n_logits(self):
        return self.n_classes * self.n_audio_chans


# ----------------------------- kernel ----------------------------------------
def wavenet_kernel(dilations,
                   x_ref, ws_ref, bs_ref, convw_ref, convb_ref,
                   rsw_ref, rsb_ref, aw_ref, ab_ref, bw_ref, bb_ref,
                   out_ref):
    nb, cin, wp = x_ref.shape
    cn = ws_ref.shape[0]
    ksize = ws_ref.shape[1] // cin
    two_r = convw_ref.shape[1]
    r = two_r // 2
    csk = rsw_ref.shape[1] - cn

    # Lane (time) index, built once and reused by every shift mask.
    lane_t = lax.broadcasted_iota(jnp.int32, (1, wp), 1)

    def shift_t(v, s):
        # y[:, t] = v[:, t - s], zero for t < s (causal shift along time).
        # Roll runs on the XLU; the wrap-around is masked off with a select.
        if s == 0:
            return v
        rolled = pltpu.roll(v, shift=s, axis=1)
        return jnp.where(lane_t < s, 0.0, rolled)

    for n in range(nb):                                   # static batch block
        x = x_ref[n].astype(jnp.float32)                  # (Cin, Wp)

        # ---- first ("shifted") causal conv: Cin*K is tiny -> VPU FMAs -------
        h = jnp.zeros((cn, wp), jnp.float32) + bs_ref[...]          # (Cn, Wp)
        for k in range(ksize):
            xs = shift_t(x, ksize - k)                    # x[t - (K - k)]
            for c in range(cin):
                j = c * ksize + k
                h = h + xs[c:c + 1, :] * ws_ref[:, j:j + 1]

        skips = jnp.zeros((csk, wp), jnp.float32)

        # ---- residual stack --------------------------------------------------
        for l, d in enumerate(dilations):                 # static unroll
            # K taps fused along the contraction dim: (2R, K*Cn) @ (K*Cn, Wp).
            taps = [shift_t(h, (ksize - 1 - k) * d) for k in range(ksize)]
            hcat = jnp.concatenate(taps, axis=0).astype(convw_ref.dtype)
            z = jnp.dot(convw_ref[l], hcat,
                        preferred_element_type=jnp.float32) + convb_ref[l]
            # GLU: filter/gate split is a sublane slice (multiple of 8).
            gated = z[:r, :] * jax.nn.sigmoid(z[r:, :])   # (R, Wp), f32
            # Fused res1x1 + skip1x1: (Cn+Csk, R) @ (R, Wp).
            rs = jnp.dot(rsw_ref[l], gated.astype(rsw_ref.dtype),
                         preferred_element_type=jnp.float32) + rsb_ref[l]
            h = rs[:cn, :] + h
            skips = skips + rs[cn:, :]

        # ---- head ------------------------------------------------------------
        hs = jnp.maximum(skips, 0.0)
        he = jnp.dot(aw_ref[...], hs.astype(aw_ref.dtype),
                     preferred_element_type=jnp.float32) + ab_ref[...]
        he = jnp.maximum(he, 0.0)                         # a1x1 has relu=True
        logits = jnp.dot(bw_ref[...], he.astype(bw_ref.dtype),
                         preferred_element_type=jnp.float32) + bb_ref[...]
        out_ref[n] = logits.astype(out_ref.dtype)         # (n_logits, Wp), dense


# ------------------------------- wrapper --------------------------------------
def _pick_batch_block(n, wp, max_block_elems=4096):
    """A few batch elements per grid step, but keep >= 2 steps when possible."""
    limit = max(1, min(8, max_block_elems // max(wp, 1)))
    if n >= 2:
        limit = min(limit, n // 2)      # leave work for both v7x TensorCores
    nb = 1
    for cand in range(1, max(limit, 1) + 1):
        if n % cand == 0:
            nb = cand
    return nb


def wavenet_forward(x_ncw, params, cfg, mxu_dtype=jnp.bfloat16):
    N, Cin, W = x_ncw.shape
    assert Cin == cfg.n_input_chans()
    K = cfg.kernel_size
    Cn, R = cfg.n_chans, cfg.n_chans_res
    Csk, Ce = cfg.n_chans_skip, cfg.n_chans_end
    n_logits = cfg.n_logits()
    dilations = tuple(2 ** i for _ in range(cfg.dilation_stacks)
                      for i in range(cfg.n_layers))
    f32 = jnp.float32

    # Pad time to a lane multiple: dense stores, aligned rolls.  Causality =>
    # trailing pad never influences real output timesteps.
    Wp = pl.cdiv(W, 128) * 128
    x_p = jnp.pad(x_ncw.astype(f32), ((0, 0), (0, 0), (0, Wp - W)))

    # ---- repack PyTorch-shaped weights into channel-major matmul form -------
    # shifted conv (Cn, Cin, K): columns ordered (c, k); VPU path keeps f32.
    ws2 = params['shifted_w'].reshape(Cn, Cin * K).astype(f32)
    bs2 = params['shifted_b'].reshape(Cn, 1).astype(f32)
    # ResBlock conv (2R, Cn, K): taps stacked along the contraction dim,
    # tap-major columns -> (2R, K*Cn); tap k multiplies h[t - (K-1-k)*d].
    convw = jnp.stack([jnp.transpose(w, (0, 2, 1)).reshape(2 * R, K * Cn)
                       for w in params['conv_w']]).astype(mxu_dtype)
    convb = jnp.stack([b.reshape(2 * R, 1)
                       for b in params['conv_b']]).astype(f32)
    # Fused res1x1 + skip1x1 -> (Cn + Csk, R).
    rsw = jnp.stack([jnp.concatenate([rw[:, :, 0], sw[:, :, 0]], axis=0)
                     for rw, sw in zip(params['res_w'], params['skip_w'])]
                    ).astype(mxu_dtype)
    rsb = jnp.stack([jnp.concatenate([rb, sb], axis=0).reshape(Cn + Csk, 1)
                     for rb, sb in zip(params['res_b'], params['skip_b'])]
                    ).astype(f32)
    aw = params['a_w'][:, :, 0].astype(mxu_dtype)
    ab = params['a_b'].reshape(Ce, 1).astype(f32)
    bw = params['b_w'][:, :, 0].astype(mxu_dtype)
    bb = params['b_b'].reshape(n_logits, 1).astype(f32)

    nb = _pick_batch_block(N, Wp)

    def full_spec(a):
        nd = a.ndim
        return pl.BlockSpec(a.shape, lambda i, _nd=nd: (0,) * _nd)

    out_p = pl.pallas_call(
        functools.partial(wavenet_kernel, dilations),
        out_shape=jax.ShapeDtypeStruct((N, n_logits, Wp), jnp.float32),
        grid=(N // nb,),
        in_specs=[
            pl.BlockSpec((nb, Cin, Wp), lambda i: (i, 0, 0)),
            full_spec(ws2), full_spec(bs2),
            full_spec(convw), full_spec(convb),
            full_spec(rsw), full_spec(rsb),
            full_spec(aw), full_spec(ab), full_spec(bw), full_spec(bb),
        ],
        out_specs=pl.BlockSpec((nb, n_logits, Wp), lambda i: (i, 0, 0)),
        compiler_params=pltpu.CompilerParams(
            dimension_semantics=("parallel",)),
    )(x_p, ws2, bs2, convw, convb, rsw, rsb, aw, ab, bw, bb)

    logits_ncw = out_p[:, :, :W]                           # (N, n_logits, W)
    return logits_ncw.reshape(N, cfg.n_classes, cfg.n_audio_chans, W)


# ----------------------- pure-JAX reference (for verification) ---------------
def _conv1d_ref(x, w, b, dilation=1, causal=False, shifted=False):
    K = w.shape[2]
    if shifted:  # F.pad(x, (1, -1)): prepend zero, drop last
        x = jnp.concatenate([jnp.zeros_like(x[:, :, :1]), x[:, :, :-1]], axis=2)
    if shifted or causal:
        x = jnp.pad(x, ((0, 0), (0, 0), ((K - 1) * dilation, 0)))
    y = lax.conv_general_dilated(x, w, window_strides=(1,), padding='VALID',
                                 rhs_dilation=(dilation,),
                                 dimension_numbers=('NCH', 'OIH', 'NCH'))
    return y + b[None, :, None]


def wavenet_reference(x, params, cfg):
    N, _, W = x.shape
    dilations = tuple(2 ** i for _ in range(cfg.dilation_stacks)
                      for i in range(cfg.n_layers))
    h = _conv1d_ref(x, params['shifted_w'], params['shifted_b'],
                    dilation=1, causal=True, shifted=True)
    skips = 0.0
    for l, d in enumerate(dilations):
        z = _conv1d_ref(h, params['conv_w'][l], params['conv_b'][l],
                        dilation=d, causal=True)
        R = z.shape[1] // 2
        gated = z[:, :R] * jax.nn.sigmoid(z[:, R:])
        h = _conv1d_ref(gated, params['res_w'][l], params['res_b'][l]) + h
        skips = skips + _conv1d_ref(gated, params['skip_w'][l], params['skip_b'][l])
    h = jax.nn.relu(skips)
    h = jax.nn.relu(_conv1d_ref(h, params['a_w'], params['a_b']))
    logits = _conv1d_ref(h, params['b_w'], params['b_b'])
    return logits.reshape(N, cfg.n_classes, cfg.n_audio_chans, W)


# ------------------------------- init & main ----------------------------------
def init_params(key, cfg):
    K = cfg.kernel_size
    Cin = cfg.n_input_chans()
    Cn, R = cfg.n_chans, cfg.n_chans_res
    Csk, Ce = cfg.n_chans_skip, cfg.n_chans_end
    L = cfg.dilation_stacks * cfg.n_layers
    n_logits = cfg.n_logits()
    keys = iter(jax.random.split(key, 6 * L + 8))

    def g(shape, scale=0.1):
        return scale * jax.random.normal(next(keys), shape, jnp.float32)

    return dict(
        shifted_w=g((Cn, Cin, K)), shifted_b=g((Cn,)),
        conv_w=[g((2 * R, Cn, K)) for _ in range(L)],
        conv_b=[g((2 * R,)) for _ in range(L)],
        res_w=[g((Cn, R, 1)) for _ in range(L)],
        res_b=[g((Cn,)) for _ in range(L)],
        skip_w=[g((Csk, R, 1)) for _ in range(L)],
        skip_b=[g((Csk,)) for _ in range(L)],
        a_w=g((Ce, Csk, 1)), a_b=g((Ce,)),
        b_w=g((n_logits, Ce, 1)), b_b=g((n_logits,)),
    )


if __name__ == "__main__":
    cfg = Cfg()
    key = jax.random.PRNGKey(0)
    kx, kp = jax.random.split(key)

    N, W = 2, 16
    x = jax.random.normal(kx, (N, cfg.n_input_chans(), W), jnp.float32)
    params = init_params(kp, cfg)

    ref = wavenet_reference(x, params, cfg)

    # f32-fed MXU path: tight check against the XLA conv reference.
    out_f32 = jax.block_until_ready(
        wavenet_forward(x, params, cfg, mxu_dtype=jnp.float32))
    assert out_f32.shape == (N, cfg.n_classes, cfg.n_audio_chans, W)
    np.testing.assert_allclose(np.asarray(out_f32), np.asarray(ref),
                               rtol=5e-3, atol=5e-3)

    # Default bf16-fed MXU path (f32 accumulate): looser tolerance.
    out = jax.block_until_ready(wavenet_forward(x, params, cfg))
    assert out.shape == (N, cfg.n_classes, cfg.n_audio_chans, W)
    np.testing.assert_allclose(np.asarray(out), np.asarray(ref),
                               rtol=3e-2, atol=3e-2)
    print("KERNEL_OK")
</pallas_src>

<mosaic_0001>
module attributes {stable_mosaic.version = 11 : i64} {
  func.func @wavenet_kernel(%arg0: i32, %arg1: memref<1x1x128xf32, #tpu.memory_space<vmem>>, %arg2: memref<32x2xf32, #tpu.memory_space<vmem>>, %arg3: memref<32x1xf32, #tpu.memory_space<vmem>>, %arg4: memref<3x32x64xf32, #tpu.memory_space<vmem>>, %arg5: memref<3x32x1xf32, #tpu.memory_space<vmem>>, %arg6: memref<3x64x16xf32, #tpu.memory_space<vmem>>, %arg7: memref<3x64x1xf32, #tpu.memory_space<vmem>>, %arg8: memref<32x32xf32, #tpu.memory_space<vmem>>, %arg9: memref<32x1xf32, #tpu.memory_space<vmem>>, %arg10: memref<8x32xf32, #tpu.memory_space<vmem>>, %arg11: memref<8x1xf32, #tpu.memory_space<vmem>>, %arg12: memref<1x8x128xf32, #tpu.memory_space<vmem>>) attributes {dimension_semantics = [#tpu.dimension_semantics<parallel>], iteration_bounds = array<i64: 2>, scalar_prefetch = 0 : i64, scratch_operands = 0 : i64, tpu.core_type = #tpu.core_type<tc>, window_params = [{transform_indices = @transform_0, window_bounds = array<i64: 1, 1, 128>}, {pipeline_mode = #tpu.pipeline_mode<synchronous>, transform_indices = @transform_1, window_bounds = array<i64: 32, 2>}, {pipeline_mode = #tpu.pipeline_mode<synchronous>, transform_indices = @transform_2, window_bounds = array<i64: 32, 1>}, {pipeline_mode = #tpu.pipeline_mode<synchronous>, transform_indices = @transform_3, window_bounds = array<i64: 3, 32, 64>}, {pipeline_mode = #tpu.pipeline_mode<synchronous>, transform_indices = @transform_4, window_bounds = array<i64: 3, 32, 1>}, {pipeline_mode = #tpu.pipeline_mode<synchronous>, transform_indices = @transform_5, window_bounds = array<i64: 3, 64, 16>}, {pipeline_mode = #tpu.pipeline_mode<synchronous>, transform_indices = @transform_6, window_bounds = array<i64: 3, 64, 1>}, {pipeline_mode = #tpu.pipeline_mode<synchronous>, transform_indices = @transform_7, window_bounds = array<i64: 32, 32>}, {pipeline_mode = #tpu.pipeline_mode<synchronous>, transform_indices = @transform_8, window_bounds = array<i64: 32, 1>}, {pipeline_mode = #tpu.pipeline_mode<synchronous>, transform_indices = @transform_9, window_bounds = array<i64: 8, 32>}, {pipeline_mode = #tpu.pipeline_mode<synchronous>, transform_indices = @transform_10, window_bounds = array<i64: 8, 1>}, {transform_indices = @transform_11, window_bounds = array<i64: 1, 8, 128>}]} {
    %0 = tpu.iota {dimensions = array<i32: 1>} : vector<1x128xi32>
    %c0 = arith.constant 0 : index
    %c0_0 = arith.constant 0 : index
    %c0_1 = arith.constant 0 : index
    %1 = vector.load %arg1[%c0, %c0_0, %c0_1] : memref<1x1x128xf32, #tpu.memory_space<vmem>>, vector<1x1x128xf32>
    %2 = vector.shape_cast %1 : vector<1x1x128xf32> to vector<1x128xf32>
    %cst = arith.constant 0.000000e+00 : f32
    %3 = vector.broadcast %cst : f32 to vector<32x128xf32>
    %c0_2 = arith.constant 0 : index
    %c0_3 = arith.constant 0 : index
    %4 = vector.load %arg3[%c0_2, %c0_3] : memref<32x1xf32, #tpu.memory_space<vmem>>, vector<32x1xf32>
    %5 = vector.broadcast %4 : vector<32x1xf32> to vector<32x128xf32>
    %6 = arith.addf %3, %5 : vector<32x128xf32>
    %c2_i32 = arith.constant 2 : i32
    %7 = tpu.dynamic_rotate %2 by %c2_i32 dim 1 : vector<1x128xf32>, i32 -> vector<1x128xf32>
    %c2_i32_4 = arith.constant 2 : i32
    %8 = vector.broadcast %c2_i32_4 : i32 to vector<1x128xi32>
    %9 = arith.cmpi slt, %0, %8 : vector<1x128xi32>
    %cst_5 = arith.constant 0.000000e+00 : f32
    %10 = vector.broadcast %cst_5 : f32 to vector<1x128xf32>
    %11 = arith.select %9, %10, %7 : vector<1x128xi1>, vector<1x128xf32>
    %c0_6 = arith.constant 0 : index
    %c0_7 = arith.constant 0 : index
    %12 = vector.load %arg2[%c0_6, %c0_7] : memref<32x2xf32, #tpu.memory_space<vmem>>, vector<32x1xf32>
    %13 = vector.broadcast %11 : vector<1x128xf32> to vector<32x128xf32>
    %14 = vector.broadcast %12 : vector<32x1xf32> to vector<32x128xf32>
    %15 = arith.mulf %13, %14 : vector<32x128xf32>
    %16 = arith.addf %6, %15 : vector<32x128xf32>
    %c1_i32 = arith.constant 1 : i32
    %17 = tpu.dynamic_rotate %2 by %c1_i32 dim 1 : vector<1x128xf32>, i32 -> vector<1x128xf32>
    %c1_i32_8 = arith.constant 1 : i32
    %18 = vector.broadcast %c1_i32_8 : i32 to vector<1x128xi32>
    %19 = arith.cmpi slt, %0, %18 : vector<1x128xi32>
    %cst_9 = arith.constant 0.000000e+00 : f32
    %20 = vector.broadcast %cst_9 : f32 to vector<1x128xf32>
    %21 = arith.select %19, %20, %17 : vector<1x128xi1>, vector<1x128xf32>
    %c0_10 = arith.constant 0 : index
    %c1 = arith.constant 1 : index
    %22 = vector.load %arg2[%c0_10, %c1] : memref<32x2xf32, #tpu.memory_space<vmem>>, vector<32x1xf32>
    %23 = vector.broadcast %21 : vector<1x128xf32> to vector<32x128xf32>
    %24 = vector.broadcast %22 : vector<32x1xf32> to vector<32x128xf32>
    %25 = arith.mulf %23, %24 : vector<32x128xf32>
    %26 = arith.addf %16, %25 : vector<32x128xf32>
    %cst_11 = arith.constant 0.000000e+00 : f32
    %27 = vector.broadcast %cst_11 : f32 to vector<32x128xf32>
    %c1_i32_12 = arith.constant 1 : i32
    %28 = tpu.dynamic_rotate %26 by %c1_i32_12 dim 1 : vector<32x128xf32>, i32 -> vector<32x128xf32>
    %c1_i32_13 = arith.constant 1 : i32
    %29 = vector.broadcast %c1_i32_13 : i32 to vector<1x128xi32>
    %30 = arith.cmpi slt, %0, %29 : vector<1x128xi32>
    %cst_14 = arith.constant 0.000000e+00 : f32
    %31 = vector.shape_cast %30 : vector<1x128xi1> to vector<1x128xi1>
    %32 = vector.broadcast %31 : vector<1x128xi1> to vector<32x128xi1>
    %33 = vector.broadcast %cst_14 : f32 to vector<32x128xf32>
    %34 = arith.select %32, %33, %28 : vector<32x128xi1>, vector<32x128xf32>
    %35 = tpu.concatenate %34, %26 in 0 : vector<32x128xf32>, vector<32x128xf32> -> vector<64x128xf32>
    %c0_15 = arith.constant 0 : index
    %c0_16 = arith.constant 0 : index
    %c0_17 = arith.constant 0 : index
    %36 = vector.load %arg4[%c0_15, %c0_16, %c0_17] : memref<3x32x64xf32, #tpu.memory_space<vmem>>, vector<1x32x64xf32>
    %37 = vector.shape_cast %36 : vector<1x32x64xf32> to vector<32x64xf32>
    %cst_18 = arith.constant dense<0.000000e+00> : vector<32x128xf32>
    %38 = tpu.matmul %37, %35, %cst_18 {dimension_numbers = #tpu.dot_dimension_numbers<[1], [0], [0], [1], [0, 0, 1, 1], [], []>} : vector<32x64xf32>, vector<64x128xf32>, vector<32x128xf32> -> vector<32x128xf32>
    %c0_19 = arith.constant 0 : index
    %c0_20 = arith.constant 0 : index
    %c0_21 = arith.constant 0 : index
    %39 = vector.load %arg5[%c0_19, %c0_20, %c0_21] : memref<3x32x1xf32, #tpu.memory_space<vmem>>, vector<1x32x1xf32>
    %40 = vector.shape_cast %39 : vector<1x32x1xf32> to vector<32x1xf32>
    %41 = vector.broadcast %40 : vector<32x1xf32> to vector<32x128xf32>
    %42 = arith.addf %38, %41 : vector<32x128xf32>
    %43 = vector.extract_strided_slice %42 {offsets = [0, 0], sizes = [16, 128], strides = [1, 1]} : vector<32x128xf32> to vector<16x128xf32>
    %44 = vector.extract_strided_slice %42 {offsets = [16, 0], sizes = [16, 128], strides = [1, 1]} : vector<32x128xf32> to vector<16x128xf32>
    %45 = arith.negf %44 : vector<16x128xf32>
    %46 = math.exp %45 : vector<16x128xf32>
    %cst_22 = arith.constant 1.000000e+00 : f32
    %47 = vector.broadcast %cst_22 : f32 to vector<16x128xf32>
    %48 = arith.addf %47, %46 : vector<16x128xf32>
    %49 = arith.divf %47, %48 : vector<16x128xf32>
    %50 = arith.mulf %43, %49 : vector<16x128xf32>
    %c0_23 = arith.constant 0 : index
    %c0_24 = arith.constant 0 : index
    %c0_25 = arith.constant 0 : index
    %51 = vector.load %arg6[%c0_23, %c0_24, %c0_25] : memref<3x64x16xf32, #tpu.memory_space<vmem>>, vector<1x64x16xf32>
    %52 = vector.shape_cast %51 : vector<1x64x16xf32> to vector<64x16xf32>
    %cst_26 = arith.constant dense<0.000000e+00> : vector<64x128xf32>
    %53 = tpu.matmul %52, %50, %cst_26 {dimension_numbers = #tpu.dot_dimension_numbers<[1], [0], [0], [1], [0, 0, 1, 1], [], []>} : vector<64x16xf32>, vector<16x128xf32>, vector<64x128xf32> -> vector<64x128xf32>
    %c0_27 = arith.constant 0 : index
    %c0_28 = arith.constant 0 : index
    %c0_29 = arith.constant 0 : index
    %54 = vector.load %arg7[%c0_27, %c0_28, %c0_29] : memref<3x64x1xf32, #tpu.memory_space<vmem>>, vector<1x64x1xf32>
    %55 = vector.shape_cast %54 : vector<1x64x1xf32> to vector<64x1xf32>
    %56 = vector.broadcast %55 : vector<64x1xf32> to vector<64x128xf32>
    %57 = arith.addf %53, %56 : vector<64x128xf32>
    %58 = vector.extract_strided_slice %57 {offsets = [0, 0], sizes = [32, 128], strides = [1, 1]} : vector<64x128xf32> to vector<32x128xf32>
    %59 = arith.addf %58, %26 : vector<32x128xf32>
    %60 = vector.extract_strided_slice %57 {offsets = [32, 0], sizes = [32, 128], strides = [1, 1]} : vector<64x128xf32> to vector<32x128xf32>
    %61 = arith.addf %27, %60 : vector<32x128xf32>
    %c2_i32_30 = arith.constant 2 : i32
    %62 = tpu.dynamic_rotate %59 by %c2_i32_30 dim 1 : vector<32x128xf32>, i32 -> vector<32x128xf32>
    %c2_i32_31 = arith.constant 2 : i32
    %63 = vector.broadcast %c2_i32_31 : i32 to vector<1x128xi32>
    %64 = arith.cmpi slt, %0, %63 : vector<1x128xi32>
    %cst_32 = arith.constant 0.000000e+00 : f32
    %65 = vector.shape_cast %64 : vector<1x128xi1> to vector<1x128xi1>
    %66 = vector.broadcast %65 : vector<1x128xi1> to vector<32x128xi1>
    %67 = vector.broadcast %cst_32 : f32 to vector<32x128xf32>
    %68 = arith.select %66, %67, %62 : vector<32x128xi1>, vector<32x128xf32>
    %69 = tpu.concatenate %68, %59 in 0 : vector<32x128xf32>, vector<32x128xf32> -> vector<64x128xf32>
    %c1_33 = arith.constant 1 : index
    %c0_34 = arith.constant 0 : index
    %c0_35 = arith.constant 0 : index
    %70 = vector.load %arg4[%c1_33, %c0_34, %c0_35] : memref<3x32x64xf32, #tpu.memory_space<vmem>>, vector<1x32x64xf32>
    %71 = vector.shape_cast %70 : vector<1x32x64xf32> to vector<32x64xf32>
    %cst_36 = arith.constant dense<0.000000e+00> : vector<32x128xf32>
    %72 = tpu.matmul %71, %69, %cst_36 {dimension_numbers = #tpu.dot_dimension_numbers<[1], [0], [0], [1], [0, 0, 1, 1], [], []>} : vector<32x64xf32>, vector<64x128xf32>, vector<32x128xf32> -> vector<32x128xf32>
    %c1_37 = arith.constant 1 : index
    %c0_38 = arith.constant 0 : index
    %c0_39 = arith.constant 0 : index
    %73 = vector.load %arg5[%c1_37, %c0_38, %c0_39] : memref<3x32x1xf32, #tpu.memory_space<vmem>>, vector<1x32x1xf32>
    %74 = vector.shape_cast %73 : vector<1x32x1xf32> to vector<32x1xf32>
    %75 = vector.broadcast %74 : vector<32x1xf32> to vector<32x128xf32>
    %76 = arith.addf %72, %75 : vector<32x128xf32>
    %77 = vector.extract_strided_slice %76 {offsets = [0, 0], sizes = [16, 128], strides = [1, 1]} : vector<32x128xf32> to vector<16x128xf32>
    %78 = vector.extract_strided_slice %76 {offsets = [16, 0], sizes = [16, 128], strides = [1, 1]} : vector<32x128xf32> to vector<16x128xf32>
    %79 = arith.negf %78 : vector<16x128xf32>
    %80 = math.exp %79 : vector<16x128xf32>
    %cst_40 = arith.constant 1.000000e+00 : f32
    %81 = vector.broadcast %cst_40 : f32 to vector<16x128xf32>
    %82 = arith.addf %81, %80 : vector<16x128xf32>
    %83 = arith.divf %81, %82 : vector<16x128xf32>
    %84 = arith.mulf %77, %83 : vector<16x128xf32>
    %c1_41 = arith.constant 1 : index
    %c0_42 = arith.constant 0 : index
    %c0_43 = arith.constant 0 : index
    %85 = vector.load %arg6[%c1_41, %c0_42, %c0_43] : memref<3x64x16xf32, #tpu.memory_space<vmem>>, vector<1x64x16xf32>
    %86 = vector.shape_cast %85 : vector<1x64x16xf32> to vector<64x16xf32>
    %cst_44 = arith.constant dense<0.000000e+00> : vector<64x128xf32>
    %87 = tpu.matmul %86, %84, %cst_44 {dimension_numbers = #tpu.dot_dimension_numbers<[1], [0], [0], [1], [0, 0, 1, 1], [], []>} : vector<64x16xf32>, vector<16x128xf32>, vector<64x128xf32> -> vector<64x128xf32>
    %c1_45 = arith.constant 1 : index
    %c0_46 = arith.constant 0 : index
    %c0_47 = arith.constant 0 : index
    %88 = vector.load %arg7[%c1_45, %c0_46, %c0_47] : memref<3x64x1xf32, #tpu.memory_space<vmem>>, vector<1x64x1xf32>
    %89 = vector.shape_cast %88 : vector<1x64x1xf32> to vector<64x1xf32>
    %90 = vector.broadcast %89 : vector<64x1xf32> to vector<64x128xf32>
    %91 = arith.addf %87, %90 : vector<64x128xf32>
    %92 = vector.extract_strided_slice %91 {offsets = [0, 0], sizes = [32, 128], strides = [1, 1]} : vector<64x128xf32> to vector<32x128xf32>
    %93 = arith.addf %92, %59 : vector<32x128xf32>
    %94 = vector.extract_strided_slice %91 {offsets = [32, 0], sizes = [32, 128], strides = [1, 1]} : vector<64x128xf32> to vector<32x128xf32>
    %95 = arith.addf %61, %94 : vector<32x128xf32>
    %c4_i32 = arith.constant 4 : i32
    %96 = tpu.dynamic_rotate %93 by %c4_i32 dim 1 : vector<32x128xf32>, i32 -> vector<32x128xf32>
    %c4_i32_48 = arith.constant 4 : i32
    %97 = vector.broadcast %c4_i32_48 : i32 to vector<1x128xi32>
    %98 = arith.cmpi slt, %0, %97 : vector<1x128xi32>
    %cst_49 = arith.constant 0.000000e+00 : f32
    %99 = vector.shape_cast %98 : vector<1x128xi1> to vector<1x128xi1>
    %100 = vector.broadcast %99 : vector<1x128xi1> to vector<32x128xi1>
    %101 = vector.broadcast %cst_49 : f32 to vector<32x128xf32>
    %102 = arith.select %100, %101, %96 : vector<32x128xi1>, vector<32x128xf32>
    %103 = tpu.concatenate %102, %93 in 0 : vector<32x128xf32>, vector<32x128xf32> -> vector<64x128xf32>
    %c2 = arith.constant 2 : index
    %c0_50 = arith.constant 0 : index
    %c0_51 = arith.constant 0 : index
    %104 = vector.load %arg4[%c2, %c0_50, %c0_51] : memref<3x32x64xf32, #tpu.memory_space<vmem>>, vector<1x32x64xf32>
    %105 = vector.shape_cast %104 : vector<1x32x64xf32> to vector<32x64xf32>
    %cst_52 = arith.constant dense<0.000000e+00> : vector<32x128xf32>
    %106 = tpu.matmul %105, %103, %cst_52 {dimension_numbers = #tpu.dot_dimension_numbers<[1], [0], [0], [1], [0, 0, 1, 1], [], []>} : vector<32x64xf32>, vector<64x128xf32>, vector<32x128xf32> -> vector<32x128xf32>
    %c2_53 = arith.constant 2 : index
    %c0_54 = arith.constant 0 : index
    %c0_55 = arith.constant 0 : index
    %107 = vector.load %arg5[%c2_53, %c0_54, %c0_55] : memref<3x32x1xf32, #tpu.memory_space<vmem>>, vector<1x32x1xf32>
    %108 = vector.shape_cast %107 : vector<1x32x1xf32> to vector<32x1xf32>
    %109 = vector.broadcast %108 : vector<32x1xf32> to vector<32x128xf32>
    %110 = arith.addf %106, %109 : vector<32x128xf32>
    %111 = vector.extract_strided_slice %110 {offsets = [0, 0], sizes = [16, 128], strides = [1, 1]} : vector<32x128xf32> to vector<16x128xf32>
    %112 = vector.extract_strided_slice %110 {offsets = [16, 0], sizes = [16, 128], strides = [1, 1]} : vector<32x128xf32> to vector<16x128xf32>
    %113 = arith.negf %112 : vector<16x128xf32>
    %114 = math.exp %113 : vector<16x128xf32>
    %cst_56 = arith.constant 1.000000e+00 : f32
    %115 = vector.broadcast %cst_56 : f32 to vector<16x128xf32>
    %116 = arith.addf %115, %114 : vector<16x128xf32>
    %117 = arith.divf %115, %116 : vector<16x128xf32>
    %118 = arith.mulf %111, %117 : vector<16x128xf32>
    %c2_57 = arith.constant 2 : index
    %c0_58 = arith.constant 0 : index
    %c0_59 = arith.constant 0 : index
    %119 = vector.load %arg6[%c2_57, %c0_58, %c0_59] : memref<3x64x16xf32, #tpu.memory_space<vmem>>, vector<1x64x16xf32>
    %120 = vector.shape_cast %119 : vector<1x64x16xf32> to vector<64x16xf32>
    %cst_60 = arith.constant dense<0.000000e+00> : vector<64x128xf32>
    %121 = tpu.matmul %120, %118, %cst_60 {dimension_numbers = #tpu.dot_dimension_numbers<[1], [0], [0], [1], [0, 0, 1, 1], [], []>} : vector<64x16xf32>, vector<16x128xf32>, vector<64x128xf32> -> vector<64x128xf32>
    %c2_61 = arith.constant 2 : index
    %c0_62 = arith.constant 0 : index
    %c0_63 = arith.constant 0 : index
    %122 = vector.load %arg7[%c2_61, %c0_62, %c0_63] : memref<3x64x1xf32, #tpu.memory_space<vmem>>, vector<1x64x1xf32>
    %123 = vector.shape_cast %122 : vector<1x64x1xf32> to vector<64x1xf32>
    %124 = vector.broadcast %123 : vector<64x1xf32> to vector<64x128xf32>
    %125 = arith.addf %121, %124 : vector<64x128xf32>
    %126 = vector.extract_strided_slice %125 {offsets = [32, 0], sizes = [32, 128], strides = [1, 1]} : vector<64x128xf32> to vector<32x128xf32>
    %127 = arith.addf %95, %126 : vector<32x128xf32>
    %cst_64 = arith.constant 0.000000e+00 : f32
    %128 = vector.broadcast %cst_64 : f32 to vector<32x128xf32>
    %129 = arith.maximumf %127, %128 : vector<32x128xf32>
    %c0_65 = arith.constant 0 : index
    %c0_66 = arith.constant 0 : index
    %130 = vector.load %arg8[%c0_65, %c0_66] : memref<32x32xf32, #tpu.memory_space<vmem>>, vector<32x32xf32>
    %cst_67 = arith.constant dense<0.000000e+00> : vector<32x128xf32>
    %131 = tpu.matmul %130, %129, %cst_67 {dimension_numbers = #tpu.dot_dimension_numbers<[1], [0], [0], [1], [0, 0, 1, 1], [], []>} : vector<32x32xf32>, vector<32x128xf32>, vector<32x128xf32> -> vector<32x128xf32>
    %c0_68 = arith.constant 0 : index
    %c0_69 = arith.constant 0 : index
    %132 = vector.load %arg9[%c0_68, %c0_69] : memref<32x1xf32, #tpu.memory_space<vmem>>, vector<32x1xf32>
    %133 = vector.broadcast %132 : vector<32x1xf32> to vector<32x128xf32>
    %134 = arith.addf %131, %133 : vector<32x128xf32>
    %cst_70 = arith.constant 0.000000e+00 : f32
    %135 = vector.broadcast %cst_70 : f32 to vector<32x128xf32>
    %136 = arith.maximumf %134, %135 : vector<32x128xf32>
    %c0_71 = arith.constant 0 : index
    %c0_72 = arith.constant 0 : index
    %137 = vector.load %arg10[%c0_71, %c0_72] : memref<8x32xf32, #tpu.memory_space<vmem>>, vector<8x32xf32>
    %cst_73 = arith.constant dense<0.000000e+00> : vector<8x128xf32>
    %138 = tpu.matmul %137, %136, %cst_73 {dimension_numbers = #tpu.dot_dimension_numbers<[1], [0], [0], [1], [0, 0, 1, 1], [], []>} : vector<8x32xf32>, vector<32x128xf32>, vector<8x128xf32> -> vector<8x128xf32>
    %c0_74 = arith.constant 0 : index
    %c0_75 = arith.constant 0 : index
    %139 = vector.load %arg11[%c0_74, %c0_75] : memref<8x1xf32, #tpu.memory_space<vmem>>, vector<8x1xf32>
    %140 = vector.broadcast %139 : vector<8x1xf32> to vector<8x128xf32>
    %141 = arith.addf %138, %140 : vector<8x128xf32>
    %c0_76 = arith.constant 0 : index
    %c0_77 = arith.constant 0 : index
    %c0_78 = arith.constant 0 : index
    %142 = vector.load %arg12[%c0_76, %c0_77, %c0_78] : memref<1x8x128xf32, #tpu.memory_space<vmem>>, vector<1x8x128xf32>
    %143 = vector.shape_cast %142 : vector<1x8x128xf32> to vector<8x128xf32>
    %144 = vector.shape_cast %141 : vector<8x128xf32> to vector<1x8x128xf32>
    tpu.vector_store %arg12[%c0_76, %c0_77, %c0_78], %144 {strides = array<i32>} : memref<1x8x128xf32, #tpu.memory_space<vmem>>, vector<1x8x128xf32>,
    return
  }
  func.func @transform_0(%arg0: i32) -> (i32, i32, i32) {
    %c0_i32 = arith.constant 0 : i32
    %c0_i32_0 = arith.constant 0 : i32
    %c0_i32_1 = arith.constant 0 : i32
    return %arg0, %c0_i32, %c0_i32_0 : i32, i32, i32
  }
  func.func @transform_1(%arg0: i32) -> (i32, i32) {
    %c0_i32 = arith.constant 0 : i32
    %c0_i32_0 = arith.constant 0 : i32
    %c0_i32_1 = arith.constant 0 : i32
    return %c0_i32, %c0_i32_0 : i32, i32
  }
  func.func @transform_2(%arg0: i32) -> (i32, i32) {
    %c0_i32 = arith.constant 0 : i32
    %c0_i32_0 = arith.constant 0 : i32
    %c0_i32_1 = arith.constant 0 : i32
    return %c0_i32, %c0_i32_0 : i32, i32
  }
  func.func @transform_3(%arg0: i32) -> (i32, i32, i32) {
    %c0_i32 = arith.constant 0 : i32
    %c0_i32_0 = arith.constant 0 : i32
    %c0_i32_1 = arith.constant 0 : i32
    %c0_i32_2 = arith.constant 0 : i32
    return %c0_i32, %c0_i32_0, %c0_i32_1 : i32, i32, i32
  }
  func.func @transform_4(%arg0: i32) -> (i32, i32, i32) {
    %c0_i32 = arith.constant 0 : i32
    %c0_i32_0 = arith.constant 0 : i32
    %c0_i32_1 = arith.constant 0 : i32
    %c0_i32_2 = arith.constant 0 : i32
    return %c0_i32, %c0_i32_0, %c0_i32_1 : i32, i32, i32
  }
  func.func @transform_5(%arg0: i32) -> (i32, i32, i32) {
    %c0_i32 = arith.constant 0 : i32
    %c0_i32_0 = arith.constant 0 : i32
    %c0_i32_1 = arith.constant 0 : i32
    %c0_i32_2 = arith.constant 0 : i32
    return %c0_i32, %c0_i32_0, %c0_i32_1 : i32, i32, i32
  }
  func.func @transform_6(%arg0: i32) -> (i32, i32, i32) {
    %c0_i32 = arith.constant 0 : i32
    %c0_i32_0 = arith.constant 0 : i32
    %c0_i32_1 = arith.constant 0 : i32
    %c0_i32_2 = arith.constant 0 : i32
    return %c0_i32, %c0_i32_0, %c0_i32_1 : i32, i32, i32
  }
  func.func @transform_7(%arg0: i32) -> (i32, i32) {
    %c0_i32 = arith.constant 0 : i32
    %c0_i32_0 = arith.constant 0 : i32
    %c0_i32_1 = arith.constant 0 : i32
    return %c0_i32, %c0_i32_0 : i32, i32
  }
  func.func @transform_8(%arg0: i32) -> (i32, i32) {
    %c0_i32 = arith.constant 0 : i32
    %c0_i32_0 = arith.constant 0 : i32
    %c0_i32_1 = arith.constant 0 : i32
    return %c0_i32, %c0_i32_0 : i32, i32
  }
  func.func @transform_9(%arg0: i32) -> (i32, i32) {
    %c0_i32 = arith.constant 0 : i32
    %c0_i32_0 = arith.constant 0 : i32
    %c0_i32_1 = arith.constant 0 : i32
    return %c0_i32, %c0_i32_0 : i32, i32
  }
  func.func @transform_10(%arg0: i32) -> (i32, i32) {
    %c0_i32 = arith.constant 0 : i32
    %c0_i32_0 = arith.constant 0 : i32
    %c0_i32_1 = arith.constant 0 : i32
    return %c0_i32, %c0_i32_0 : i32, i32
  }
  func.func @transform_11(%arg0: i32) -> (i32, i32, i32) {
    %c0_i32 = arith.constant 0 : i32
    %c0_i32_0 = arith.constant 0 : i32
    %c0_i32_1 = arith.constant 0 : i32
    return %arg0, %c0_i32, %c0_i32_0 : i32, i32, i32
  }
}

</mosaic_0001>

<llo_original>
// kernel: tpu_custom_call.1
$region0: #{tpu_custom_call.1}
  #allocation0 [shape = 'u32[]', space=smem, size = 0x4, offset = 0x4, fixed_abs, tag = 'smem constant byte address 0x4 - core index']
  #allocation1 [shape = 'u32[144,128]{1,0:T(1,128)}', space=vmem, size = 0x12000, scoped, tag = 'internal scratch']
  %s0 = inlined_call_operand.vmem [shape: f32[2,1,128], index: 0, kind: input, shape index: {}]
  %s1 = inlined_call_operand.vmem [shape: f32[32,2], index: 1, kind: input, shape index: {}]
  %s2 = inlined_call_operand.vmem [shape: f32[32,1], index: 2, kind: input, shape index: {}]
  %s3 = inlined_call_operand.vmem [shape: f32[3,32,64], index: 3, kind: input, shape index: {}]
  %s4 = inlined_call_operand.vmem [shape: f32[3,32,1], index: 4, kind: input, shape index: {}]
  %s5 = inlined_call_operand.vmem [shape: f32[3,64,16], index: 5, kind: input, shape index: {}]
  %s6 = inlined_call_operand.vmem [shape: f32[3,64,1], index: 6, kind: input, shape index: {}]
  %s7 = inlined_call_operand.vmem [shape: f32[32,32], index: 7, kind: input, shape index: {}]
  %s8 = inlined_call_operand.vmem [shape: f32[32,1], index: 8, kind: input, shape index: {}]
  %s9 = inlined_call_operand.vmem [shape: f32[8,32], index: 9, kind: input, shape index: {}]
  %s10 = inlined_call_operand.vmem [shape: f32[8,1], index: 10, kind: input, shape index: {}]
  %s11 = inlined_call_operand.hbm [shape: f32[2,8,128], index: 11, kind: output, shape index: {}]
  %s12 = sld [smem:[#allocation0]]
  $region77: #{tpu_custom_call.1} parent=0
    _
  %s14 = ssub.s32 1, %s12
  %s15 = scalar_select 0, %s14, %s12
  $region1: #{tpu_custom_call.1} parent=0
    #allocation2 [shape = 'u8[8192]{0}', space=vmem, size = 0x2000, scoped, tag = 'output window, operand 0']
    #allocation3 [shape = 's32[2]{0}', space=sflag, size = 0x8, scoped, tag = 'scoped memory for tpu_custom_call.1']
    %16 = vsyncpa [#allocation3], 0
    %s17 = scalar_lea.sflag [#allocation3], 1
    %18 = vsyncpa %s17, 0
    loop: start=0, step=1, limit=4
    $region2: #{tpu_custom_call.1} parent=1 // loop_pre_header
      _
    $region3: #{tpu_custom_call.1} parent=1 // loop_header
      %s20 = sphi 0, %s24
      %p21 = scmp.ge.s32.totalorder %s20, 4
      %s30 = sphi 0, %s32
      %s33 = sphi 0, %s30
      %s34 = sphi 0, %s33
      %s50 = sphi 0, %s34
      %s54 = sphi 0, %s54
      %s56 = sphi 0, %s54
      %s57 = sphi 0, %s56
      %s71 = sphi 0, %s57
      %s75 = sphi 0, %s75
      %s77 = sphi 0, %s75
      %s78 = sphi 0, %s77
      %s92 = sphi 0, %s78
      %s96 = sphi 0, %s96
      %s98 = sphi 0, %s96
      %s99 = sphi 0, %s98
      %s113 = sphi 0, %s99
      %s117 = sphi 0, %s117
      %s119 = sphi 0, %s117
      %s120 = sphi 0, %s119
      %s134 = sphi 0, %s120
      %s138 = sphi 0, %s138
      %s140 = sphi 0, %s138
      %s141 = sphi 0, %s140
      %s155 = sphi 0, %s141
      %s159 = sphi 0, %s159
      %s161 = sphi 0, %s159
      %s162 = sphi 0, %s161
      %s176 = sphi 0, %s162
      %s180 = sphi 0, %s180
      %s182 = sphi 0, %s180
      %s183 = sphi 0, %s182
      %s197 = sphi 0, %s183
      %s201 = sphi 0, %s201
      %s203 = sphi 0, %s201
      %s204 = sphi 0, %s203
      %s218 = sphi 0, %s204
      %s222 = sphi 0, %s222
      %s224 = sphi 0, %s222
      %s225 = sphi 0, %s224
      %s239 = sphi 0, %s225
      %s243 = sphi 0, %s243
      %s245 = sphi 0, %s243
      %s246 = sphi 0, %s245
      %s260 = sphi 0, %s246
      %s266 = sphi 0, %s268
      %s269 = sphi 0, %s266
      %s270 = sphi 0, %s269
      %s286 = sphi 0, %s270
    $region4: #{tpu_custom_call.1} parent=1 // loop_header_branch
      %23 = sbr.rel (%p21) target = $region8
    $region5: #{tpu_custom_call.1} parent=1 // loop_body
      %s25 = ssub.s32 %s20, 1
      %s26 = ssub.s32 %s20, 2
      %s27 = sadd.s32 %s20, 1
      %s28 = ssub.s32 %s20, %s27
      %p29 = scmp.eq.s32.totalorder %s28, 0
      %s31 = sadd.s32 %s30, 1
      %s32 = scalar_select %p29, %s30, %s31
      %p35 = pneg %p29
      %p36 = scmp.eq.s32.totalorder %s20, 1
      %p37 = por %p35, %p36
      %p38 = scmp.ne.s32.totalorder %s30, %s33
      %p39 = scmp.eq.s32.totalorder %s20, 0
      %p40 = por %p38, %p39
      %p41 = scmp.ne.s32.totalorder %s30, %s33
      %p42 = scmp.eq.s32.totalorder %s25, 1
      %p43 = por %p41, %p42
      %p44 = scmp.ne.s32.totalorder %s33, %s34
      %p45 = scmp.eq.s32.totalorder %s25, 0
      %p46 = por %p44, %p45
      %p47 = scmp.ne.s32.totalorder %s33, %s34
      %p48 = scmp.eq.s32.totalorder %s26, 1
      %p49 = por %p47, %p48
      %p51 = scmp.ne.s32.totalorder %s34, %s50
      %p52 = scmp.eq.s32.totalorder %s26, 0
      %p53 = por %p51, %p52
      %s55 = sadd.s32 %s54, 1
      %p58 = scmp.eq.s32.totalorder %s20, 1
      %p59 = scmp.ne.s32.totalorder %s54, %s56
      %p60 = scmp.eq.s32.totalorder %s20, 0
      %p61 = por %p59, %p60
      %p62 = scmp.ne.s32.totalorder %s54, %s56
      %p63 = scmp.eq.s32.totalorder %s25, 1
      %p64 = por %p62, %p63
      %p65 = scmp.ne.s32.totalorder %s56, %s57
      %p66 = scmp.eq.s32.totalorder %s25, 0
      %p67 = por %p65, %p66
      %p68 = scmp.ne.s32.totalorder %s56, %s57
      %p69 = scmp.eq.s32.totalorder %s26, 1
      %p70 = por %p68, %p69
      %p72 = scmp.ne.s32.totalorder %s57, %s71
      %p73 = scmp.eq.s32.totalorder %s26, 0
      %p74 = por %p72, %p73
      %s76 = sadd.s32 %s75, 1
      %p79 = scmp.eq.s32.totalorder %s20, 1
      %p80 = scmp.ne.s32.totalorder %s75, %s77
      %p81 = scmp.eq.s32.totalorder %s20, 0
      %p82 = por %p80, %p81
      %p83 = scmp.ne.s32.totalorder %s75, %s77
      %p84 = scmp.eq.s32.totalorder %s25, 1
      %p85 = por %p83, %p84
      %p86 = scmp.ne.s32.totalorder %s77, %s78
      %p87 = scmp.eq.s32.totalorder %s25, 0
      %p88 = por %p86, %p87
      %p89 = scmp.ne.s32.totalorder %s77, %s78
      %p90 = scmp.eq.s32.totalorder %s26, 1
      %p91 = por %p89, %p90
      %p93 = scmp.ne.s32.totalorder %s78, %s92
      %p94 = scmp.eq.s32.totalorder %s26, 0
      %p95 = por %p93, %p94
      %s97 = sadd.s32 %s96, 1
      %p100 = scmp.eq.s32.totalorder %s20, 1
      %p101 = scmp.ne.s32.totalorder %s96, %s98
      %p102 = scmp.eq.s32.totalorder %s20, 0
      %p103 = por %p101, %p102
      %p104 = scmp.ne.s32.totalorder %s96, %s98
      %p105 = scmp.eq.s32.totalorder %s25, 1
      %p106 = por %p104, %p105
      %p107 = scmp.ne.s32.totalorder %s98, %s99
      %p108 = scmp.eq.s32.totalorder %s25, 0
      %p109 = por %p107, %p108
      %p110 = scmp.ne.s32.totalorder %s98, %s99
      %p111 = scmp.eq.s32.totalorder %s26, 1
      %p112 = por %p110, %p111
      %p114 = scmp.ne.s32.totalorder %s99, %s113
      %p115 = scmp.eq.s32.totalorder %s26, 0
      %p116 = por %p114, %p115
      %s118 = sadd.s32 %s117, 1
      %p121 = scmp.eq.s32.totalorder %s20, 1
      %p122 = scmp.ne.s32.totalorder %s117, %s119
      %p123 = scmp.eq.s32.totalorder %s20, 0
      %p124 = por %p122, %p123
      %p125 = scmp.ne.s32.totalorder %s117, %s119
      %p126 = scmp.eq.s32.totalorder %s25, 1
      %p127 = por %p125, %p126
      %p128 = scmp.ne.s32.totalorder %s119, %s120
      %p129 = scmp.eq.s32.totalorder %s25, 0
      %p130 = por %p128, %p129
      %p131 = scmp.ne.s32.totalorder %s119, %s120
      %p132 = scmp.eq.s32.totalorder %s26, 1
      %p133 = por %p131, %p132
      %p135 = scmp.ne.s32.totalorder %s120, %s134
      %p136 = scmp.eq.s32.totalorder %s26, 0
      %p137 = por %p135, %p136
      %s139 = sadd.s32 %s138, 1
      %p142 = scmp.eq.s32.totalorder %s20, 1
      %p143 = scmp.ne.s32.totalorder %s138, %s140
      %p144 = scmp.eq.s32.totalorder %s20, 0
      %p145 = por %p143, %p144
      %p146 = scmp.ne.s32.totalorder %s138, %s140
      %p147 = scmp.eq.s32.totalorder %s25, 1
      %p148 = por %p146, %p147
      %p149 = scmp.ne.s32.totalorder %s140, %s141
      %p150 = scmp.eq.s32.totalorder %s25, 0
      %p151 = por %p149, %p150
      %p152 = scmp.ne.s32.totalorder %s140, %s141
      %p153 = scmp.eq.s32.totalorder %s26, 1
      %p154 = por %p152, %p153
      %p156 = scmp.ne.s32.totalorder %s141, %s155
      %p157 = scmp.eq.s32.totalorder %s26, 0
      %p158 = por %p156, %p157
      %s160 = sadd.s32 %s159, 1
      %p163 = scmp.eq.s32.totalorder %s20, 1
      %p164 = scmp.ne.s32.totalorder %s159, %s161
      %p165 = scmp.eq.s32.totalorder %s20, 0
      %p166 = por %p164, %p165
      %p167 = scmp.ne.s32.totalorder %s159, %s161
      %p168 = scmp.eq.s32.totalorder %s25, 1
      %p169 = por %p167, %p168
      %p170 = scmp.ne.s32.totalorder %s161, %s162
      %p171 = scmp.eq.s32.totalorder %s25, 0
      %p172 = por %p170, %p171
      %p173 = scmp.ne.s32.totalorder %s161, %s162
      %p174 = scmp.eq.s32.totalorder %s26, 1
      %p175 = por %p173, %p174
      %p177 = scmp.ne.s32.totalorder %s162, %s176
      %p178 = scmp.eq.s32.totalorder %s26, 0
      %p179 = por %p177, %p178
      %s181 = sadd.s32 %s180, 1
      %p184 = scmp.eq.s32.totalorder %s20, 1
      %p185 = scmp.ne.s32.totalorder %s180, %s182
      %p186 = scmp.eq.s32.totalorder %s20, 0
      %p187 = por %p185, %p186
      %p188 = scmp.ne.s32.totalorder %s180, %s182
      %p189 = scmp.eq.s32.totalorder %s25, 1
      %p190 = por %p188, %p189
      %p191 = scmp.ne.s32.totalorder %s182, %s183
      %p192 = scmp.eq.s32.totalorder %s25, 0
      %p193 = por %p191, %p192
      %p194 = scmp.ne.s32.totalorder %s182, %s183
      %p195 = scmp.eq.s32.totalorder %s26, 1
      %p196 = por %p194, %p195
      %p198 = scmp.ne.s32.totalorder %s183, %s197
      %p199 = scmp.eq.s32.totalorder %s26, 0
      %p200 = por %p198, %p199
      %s202 = sadd.s32 %s201, 1
      %p205 = scmp.eq.s32.totalorder %s20, 1
      %p206 = scmp.ne.s32.totalorder %s201, %s203
      %p207 = scmp.eq.s32.totalorder %s20, 0
      %p208 = por %p206, %p207
      %p209 = scmp.ne.s32.totalorder %s201, %s203
      %p210 = scmp.eq.s32.totalorder %s25, 1
      %p211 = por %p209, %p210
      %p212 = scmp.ne.s32.totalorder %s203, %s204
      %p213 = scmp.eq.s32.totalorder %s25, 0
      %p214 = por %p212, %p213
      %p215 = scmp.ne.s32.totalorder %s203, %s204
      %p216 = scmp.eq.s32.totalorder %s26, 1
      %p217 = por %p215, %p216
      %p219 = scmp.ne.s32.totalorder %s204, %s218
      %p220 = scmp.eq.s32.totalorder %s26, 0
      %p221 = por %p219, %p220
      %s223 = sadd.s32 %s222, 1
      %p226 = scmp.eq.s32.totalorder %s20, 1
      %p227 = scmp.ne.s32.totalorder %s222, %s224
      %p228 = scmp.eq.s32.totalorder %s20, 0
      %p229 = por %p227, %p228
      %p230 = scmp.ne.s32.totalorder %s222, %s224
      %p231 = scmp.eq.s32.totalorder %s25, 1
      %p232 = por %p230, %p231
      %p233 = scmp.ne.s32.totalorder %s224, %s225
      %p234 = scmp.eq.s32.totalorder %s25, 0
      %p235 = por %p233, %p234
      %p236 = scmp.ne.s32.totalorder %s224, %s225
      %p237 = scmp.eq.s32.totalorder %s26, 1
      %p238 = por %p236, %p237
      %p240 = scmp.ne.s32.totalorder %s225, %s239
      %p241 = scmp.eq.s32.totalorder %s26, 0
      %p242 = por %p240, %p241
      %s244 = sadd.s32 %s243, 1
      %p247 = scmp.eq.s32.totalorder %s20, 1
      %p248 = scmp.ne.s32.totalorder %s243, %s245
      %p249 = scmp.eq.s32.totalorder %s20, 0
      %p250 = por %p248, %p249
      %p251 = scmp.ne.s32.totalorder %s243, %s245
      %p252 = scmp.eq.s32.totalorder %s25, 1
      %p253 = por %p251, %p252
      %p254 = scmp.ne.s32.totalorder %s245, %s246
      %p255 = scmp.eq.s32.totalorder %s25, 0
      %p256 = por %p254, %p255
      %p257 = scmp.ne.s32.totalorder %s245, %s246
      %p258 = scmp.eq.s32.totalorder %s26, 1
      %p259 = por %p257, %p258
      %p261 = scmp.ne.s32.totalorder %s246, %s260
      %p262 = scmp.eq.s32.totalorder %s26, 0
      %p263 = por %p261, %p262
      %s264 = ssub.s32 %s20, %s27
      %p265 = scmp.eq.s32.totalorder %s264, 0
      %s267 = sadd.s32 %s266, 1
      %s268 = scalar_select %p265, %s266, %s267
      %p271 = pneg %p265
      %p272 = scmp.eq.s32.totalorder %s20, 1
      %p273 = por %p271, %p272
      %p274 = scmp.ne.s32.totalorder %s266, %s269
      %p275 = scmp.eq.s32.totalorder %s20, 0
      %p276 = por %p274, %p275
      %p277 = scmp.ne.s32.totalorder %s266, %s269
      %p278 = scmp.eq.s32.totalorder %s25, 1
      %p279 = por %p277, %p278
      %p280 = scmp.ne.s32.totalorder %s269, %s270
      %p281 = scmp.eq.s32.totalorder %s25, 0
      %p282 = por %p280, %p281
      %p283 = scmp.ne.s32.totalorder %s269, %s270
      %p284 = scmp.eq.s32.totalorder %s26, 1
      %p285 = por %p283, %p284
      %p287 = scmp.ne.s32.totalorder %s270, %s286
      %p288 = scmp.eq.s32.totalorder %s26, 0
      %p289 = por %p287, %p288
      %p290 = scmp.le.s32.totalorder 1, %s20
      %p291 = scmp.lt.s32.totalorder %s20, 3
      %p292 = pnand %p290, %p291
      %p293 = pneg %p292
      // Predicated region
      $region9: #{tpu_custom_call.1} parent=5 // pred_check
        _
      $region10: #{tpu_custom_call.1} parent=5 // pred_check_branch
        %295 = sbr.rel (%p292) target = $region12
      $region11: #{tpu_custom_call.1} parent=5 // pred_region
        %s296 = ssub.s32 %s20, 1
        // Predicated region
        $region13: #{tpu_custom_call.1} parent=11 // pred_check
          %p297 = pneg %p67
        $region14: #{tpu_custom_call.1} parent=11 // pred_check_branch
          %299 = sbr.rel (%p297) target = $region16
        $region15: #{tpu_custom_call.1} parent=11 // pred_region
          _
        $region16: #{tpu_custom_call.1} parent=11 // pred_fallthru
          _
        // Predicated region
        $region17: #{tpu_custom_call.1} parent=11 // pred_check
          %p300 = pneg %p88
        $region18: #{tpu_custom_call.1} parent=11 // pred_check_branch
          %302 = sbr.rel (%p300) target = $region20
        $region19: #{tpu_custom_call.1} parent=11 // pred_region
          _
        $region20: #{tpu_custom_call.1} parent=11 // pred_fallthru
          _
        // Predicated region
        $region21: #{tpu_custom_call.1} parent=11 // pred_check
          %p303 = pneg %p109
        $region22: #{tpu_custom_call.1} parent=11 // pred_check_branch
          %305 = sbr.rel (%p303) target = $region24
        $region23: #{tpu_custom_call.1} parent=11 // pred_region
          _
        $region24: #{tpu_custom_call.1} parent=11 // pred_fallthru
          _
        // Predicated region
        $region25: #{tpu_custom_call.1} parent=11 // pred_check
          %p306 = pneg %p130
        $region26: #{tpu_custom_call.1} parent=11 // pred_check_branch
          %308 = sbr.rel (%p306) target = $region28
        $region27: #{tpu_custom_call.1} parent=11 // pred_region
          _
        $region28: #{tpu_custom_call.1} parent=11 // pred_fallthru
          _
        // Predicated region
        $region29: #{tpu_custom_call.1} parent=11 // pred_check
          %p309 = pneg %p151
        $region30: #{tpu_custom_call.1} parent=11 // pred_check_branch
          %311 = sbr.rel (%p309) target = $region32
        $region31: #{tpu_custom_call.1} parent=11 // pred_region
          _
        $region32: #{tpu_custom_call.1} parent=11 // pred_fallthru
          _
        // Predicated region
        $region33: #{tpu_custom_call.1} parent=11 // pred_check
          %p312 = pneg %p172
        $region34: #{tpu_custom_call.1} parent=11 // pred_check_branch
          %314 = sbr.rel (%p312) target = $region36
        $region35: #{tpu_custom_call.1} parent=11 // pred_region
          _
        $region36: #{tpu_custom_call.1} parent=11 // pred_fallthru
          _
        // Predicated region
        $region37: #{tpu_custom_call.1} parent=11 // pred_check
          %p315 = pneg %p193
        $region38: #{tpu_custom_call.1} parent=11 // pred_check_branch
          %317 = sbr.rel (%p315) target = $region40
        $region39: #{tpu_custom_call.1} parent=11 // pred_region
          _
        $region40: #{tpu_custom_call.1} parent=11 // pred_fallthru
          _
        // Predicated region
        $region41: #{tpu_custom_call.1} parent=11 // pred_check
          %p318 = pneg %p214
        $region42: #{tpu_custom_call.1} parent=11 // pred_check_branch
          %320 = sbr.rel (%p318) target = $region44
        $region43: #{tpu_custom_call.1} parent=11 // pred_region
          _
        $region44: #{tpu_custom_call.1} parent=11 // pred_fallthru
          _
        // Predicated region
        $region45: #{tpu_custom_call.1} parent=11 // pred_check
          %p321 = pneg %p235
        $region46: #{tpu_custom_call.1} parent=11 // pred_check_branch
          %323 = sbr.rel (%p321) target = $region48
        $region47: #{tpu_custom_call.1} parent=11 // pred_region
          _
        $region48: #{tpu_custom_call.1} parent=11 // pred_fallthru
          _
        // Predicated region
        $region49: #{tpu_custom_call.1} parent=11 // pred_check
          %p324 = pneg %p256
        $region50: #{tpu_custom_call.1} parent=11 // pred_check_branch
          %326 = sbr.rel (%p324) target = $region52
        $region51: #{tpu_custom_call.1} parent=11 // pred_region
          _
        $region52: #{tpu_custom_call.1} parent=11 // pred_fallthru
          _
      $region12: #{tpu_custom_call.1} parent=5 // pred_fallthru
        _
      %p327 = scmp.lt.s32.totalorder %s20, 2
      // Predicated region
      $region53: #{tpu_custom_call.1} parent=5 // pred_check
        %p328 = pneg %p327
      $region54: #{tpu_custom_call.1} parent=5 // pred_check_branch
        %330 = sbr.rel (%p328) target = $region56
      $region55: #{tpu_custom_call.1} parent=5 // pred_region
        // Predicated region
        $region57: #{tpu_custom_call.1} parent=55 // pred_check
          %p331 = pneg %p40
        $region58: #{tpu_custom_call.1} parent=55 // pred_check_branch
          %333 = sbr.rel (%p331) target = $region60
        $region59: #{tpu_custom_call.1} parent=55 // pred_region
          %p334 = scmp.lt.s32.totalorder %s20, 1
          %s335 = scalar_select %p334, %s20, 1
          %s336 = scalar_lea.vmem %s0, %s335
        $region60: #{tpu_custom_call.1} parent=55 // pred_fallthru
          _
      $region56: #{tpu_custom_call.1} parent=5 // pred_fallthru
        _
      %p337 = scmp.le.s32.totalorder 1, %s20
      %p338 = scmp.lt.s32.totalorder %s20, 3
      %p339 = pnand %p337, %p338
      %p340 = pneg %p339
      // Predicated region
      $region61: #{tpu_custom_call.1} parent=5 // pred_check
        _
      $region62: #{tpu_custom_call.1} parent=5 // pred_check_branch
        %342 = sbr.rel (%p339) target = $region64
      $region63: #{tpu_custom_call.1} parent=5 // pred_region
        %s343 = ssub.s32 %s20, 1
        %p344 = scmp.lt.s32.totalorder %s25, 1
        %s345 = scalar_select %p344, %s25, 1
        %s346 = scalar_lea.vmem %s0, %s345
        %p347 = pneg %p46
        %p348 = pneg %p43
        %p349 = pneg %p67
        %p350 = pneg %p64
        %p351 = pneg %p88
        %p352 = pneg %p85
        %p353 = pneg %p109
        %p354 = pneg %p106
        %p355 = pneg %p130
        %p356 = pneg %p127
        %p357 = pneg %p151
        %p358 = pneg %p148
        %p359 = pneg %p172
        %p360 = pneg %p169
        %p361 = pneg %p193
        %p362 = pneg %p190
        %p363 = pneg %p214
        %p364 = pneg %p211
        %p365 = pneg %p235
        %p366 = pneg %p232
        %p367 = pneg %p256
        %p368 = pneg %p253
        %p369 = pneg %p282
        %p370 = pneg %p279
        %s371 = sand.u32 %s269, 1
        %s372 = scalar_lea.sflag [#allocation3], %s371
        %s373 = sand.u32 %s269, 1
        %s374 = smul.addr %s373, 8
        %s375 = scalar_lea.vmem [#allocation2], %s374
        %p376 = scmp.lt.s32.totalorder %s25, 1
        %s377 = scalar_select %p376, %s25, 1
        %s378 = scalar_lea.vmem %s0, %s377
        %v379 = vlaneseq
        %v380 = vand.u32 %v379, 127
        %v381 = vld [vmem:[%s378] sm:$0x1]
        %v382 = vld [vmem:[%s2] sm:$0xff]
        %v383 = vld [vmem:[%s2 + $0x8] sm:$0xff]
        %v384 = vld [vmem:[%s2 + $0x10] sm:$0xff]
        %v385 = vld [vmem:[%s2 + $0x18] sm:$0xff]
        %387 = vset.pattern.permute.xlu0 0
        %388 = vperm.xlu0 %387, %v382
        %v389 = vpop.permute.xlu0 %388
        %392 = vset.pattern.permute.xlu0 0
        %393 = vperm.xlu0 %392, %v383
        %v394 = vpop.permute.xlu0 %393
        %397 = vset.pattern.permute.xlu0 0
        %398 = vperm.xlu0 %397, %v384
        %v399 = vpop.permute.xlu0 %398
        %402 = vset.pattern.permute.xlu0 0
        %403 = vperm.xlu0 %402, %v385
        %v404 = vpop.permute.xlu0 %403
        %v406 = vadd.f32 %v389, 0.0
        %v407 = vadd.f32 %v394, 0.0
        %v408 = vadd.f32 %v399, 0.0
        %v409 = vadd.f32 %v404, 0.0
        %410 = vrot.lane.b32.xlu0 %v381, 2
        %v411 = vpop.permute.xlu0 %410
        %vm412 = vcmp.lt.s32.totalorder %v380, 2
        %v413 = vsel %vm412, 0.0, %v411
        %v414 = vld [vmem:[%s1] sm:$0xff]
        %v415 = vld [vmem:[%s1 + $0x8] sm:$0xff]
        %v416 = vld [vmem:[%s1 + $0x10] sm:$0xff]
        %v417 = vld [vmem:[%s1 + $0x18] sm:$0xff]
        %v418 = vlaneseq
        %v419 = vshrl.u32 %v418, 7
        %v420 = vsub.s32 0, %v419
        %v421 = vrot.slane %v413, %v420
        %423 = vset.pattern.permute.xlu0 0
        %424 = vperm.xlu0 %423, %v414
        %v425 = vpop.permute.xlu0 %424
        %428 = vset.pattern.permute.xlu0 0
        %429 = vperm.xlu0 %428, %v415
        %v430 = vpop.permute.xlu0 %429
        %433 = vset.pattern.permute.xlu0 0
        %434 = vperm.xlu0 %433, %v416
        %v435 = vpop.permute.xlu0 %434
        %438 = vset.pattern.permute.xlu0 0
        %439 = vperm.xlu0 %438, %v417
        %v440 = vpop.permute.xlu0 %439
        %v442 = vmul.f32 %v421, %v425
        %v443 = vmul.f32 %v421, %v430
        %v444 = vmul.f32 %v421, %v435
        %v445 = vmul.f32 %v421, %v440
        %v446 = vadd.f32 %v406, %v442
        %v447 = vadd.f32 %v407, %v443
        %v448 = vadd.f32 %v408, %v444
        %v449 = vadd.f32 %v409, %v445
        %450 = vrot.lane.b32.xlu0 %v381, 1
        %v451 = vpop.permute.xlu0 %450
        %vm452 = vcmp.lt.s32.totalorder %v380, 1
        %v453 = vsel %vm452, 0.0, %v451
        %v454 = vlaneseq
        %v455 = vshrl.u32 %v454, 7
        %v456 = vsub.s32 0, %v455
        %v457 = vrot.slane %v453, %v456
        %458 = vset.pattern.permute.xlu0 1
        %459 = vperm.xlu0 %458, %v414
        %v460 = vpop.permute.xlu0 %459
        %462 = vset.pattern.permute.xlu0 1
        %463 = vperm.xlu0 %462, %v415
        %v464 = vpop.permute.xlu0 %463
        %466 = vset.pattern.permute.xlu0 1
        %467 = vperm.xlu0 %466, %v416
        %v468 = vpop.permute.xlu0 %467
        %470 = vset.pattern.permute.xlu0 1
        %471 = vperm.xlu0 %470, %v417
        %v472 = vpop.permute.xlu0 %471
        %v474 = vmul.f32 %v457, %v460
        %v475 = vmul.f32 %v457, %v464
        %v476 = vmul.f32 %v457, %v468
        %v477 = vmul.f32 %v457, %v472
        %v478 = vadd.f32 %v446, %v474
        %v479 = vadd.f32 %v447, %v475
        %v480 = vadd.f32 %v448, %v476
        %v481 = vadd.f32 %v449, %v477
        %482 = vrot.lane.b32.xlu0 %v478, 1
        %v483 = vpop.permute.xlu0 %482
        %484 = vrot.lane.b32.xlu0 %v479, 1
        %v485 = vpop.permute.xlu0 %484
        %486 = vrot.lane.b32.xlu0 %v480, 1
        %v487 = vpop.permute.xlu0 %486
        %488 = vrot.lane.b32.xlu0 %v481, 1
        %v489 = vpop.permute.xlu0 %488
        %v490 = vsel %vm452, 1, 0
        %vm491 = vcmp.eq.s32.totalorder %v490, 1
        %v492 = vsel %vm491, 0.0, %v483
        %v493 = vsel %vm491, 0.0, %v485
        %v494 = vsel %vm491, 0.0, %v487
        %v495 = vsel %vm491, 0.0, %v489
        %v496 = vld [vmem:[%s3] sm:$0xff]
        %v497 = vld [vmem:[%s3 + $0x8] sm:$0xff]
        %v498 = vld [vmem:[%s3 + $0x10] sm:$0xff]
        %v499 = vld [vmem:[%s3 + $0x18] sm:$0xff]
        %v500 = vld [vmem:[%s4] sm:$0xff]
        %v501 = vld [vmem:[%s4 + $0x8] sm:$0xff]
        %v502 = vld [vmem:[%s4 + $0x10] sm:$0xff]
        %v503 = vld [vmem:[%s4 + $0x18] sm:$0xff]
        %505 = vset.pattern.permute.xlu0 0
        %506 = vperm.xlu0 %505, %v500
        %v507 = vpop.permute.xlu0 %506
        %510 = vset.pattern.permute.xlu0 0
        %511 = vperm.xlu0 %510, %v501
        %v512 = vpop.permute.xlu0 %511
        %515 = vset.pattern.permute.xlu0 0
        %516 = vperm.xlu0 %515, %v502
        %v517 = vpop.permute.xlu0 %516
        %520 = vset.pattern.permute.xlu0 0
        %521 = vperm.xlu0 %520, %v503
        %v522 = vpop.permute.xlu0 %521
        %vm524 = vcmask 523264
        %v526 = vsel %vm524, %v496, 0
        %v529 = vsel %vm524, %v497, 0
        %v532 = vsel %vm524, %v498, 0
        %v535 = vsel %vm524, %v499, 0
        %537 = vmatprep.subr.mxu0 0.0
        %538 = vmatpush1.msra.mxu0 %v492
        %539 = vmatprep.subr.mxu0 0.0
        %540 = vmatpush1.msra.mxu0 %v493
        %541 = vmatprep.subr.mxu0 0.0
        %542 = vmatpush1.msra.mxu0 %v494
        %543 = vmatprep.subr.mxu0 0.0
        %544 = vmatpush1.msra.mxu0 %v495
        %545 = vmatprep.subr.mxu0 0.0
        %546 = vmatpush1.msra.mxu0 %v478
        %547 = vmatprep.subr.mxu0 0.0
        %548 = vmatpush1.msra.mxu0 %v479
        %549 = vmatprep.subr.mxu0 0.0
        %550 = vmatpush1.msra.mxu0 %v480
        %551 = vmatprep.subr.mxu0 0.0
        %552 = vmatpush1.msra.mxu0 %v481
        %553 = vmatprep.subr.mxu0 0.0
        %554 = vmatpush1.msra.mxu0 0.0
        %555 = vmatprep.subr.mxu0 0.0
        %556 = vmatpush1.msra.mxu0 0.0
        %557 = vmatprep.subr.mxu0 0.0
        %558 = vmatpush1.msra.mxu0 0.0
        %559 = vmatprep.subr.mxu0 0.0
        %560 = vmatpush1.msra.mxu0 0.0
        %561 = vmatprep.subr.mxu0 0.0
        %562 = vmatpush1.msra.mxu0 0.0
        %563 = vmatprep.subr.mxu0 0.0
        %564 = vmatpush1.msra.mxu0 0.0
        %565 = vmatprep.subr.mxu0 0.0
        %566 = vmatpush1.msra.mxu0 0.0
        %567 = vmatprep.subr.mxu0 0.0
        %568 = vmatpush1.msra.mxu0 0.0
        %569 = vmatprep.subr.mxu0 0.0
        %570 = vmatpush1.msra.mxu0 0.0
        %571 = vmatprep.subr.mxu0 0.0
        %572 = vmatpush1.msra.mxu0 0.0
        %573 = vmatprep.subr.mxu0 0.0
        %574 = vmatpush1.msra.mxu0 0.0
        %575 = vmatprep.subr.mxu0 0.0
        %576 = vmatpush1.msra.mxu0 0.0
        %577 = vmatprep.subr.mxu0 0.0
        %578 = vmatpush1.msra.mxu0 0.0
        %579 = vmatprep.subr.mxu0 0.0
        %580 = vmatpush1.msra.mxu0 0.0
        %581 = vmatprep.subr.mxu0 0.0
        %582 = vmatpush1.msra.mxu0 0.0
        %583 = vmatprep.subr.mxu0 0.0
        %584 = vmatpush1.msra.mxu0 0.0
        %585 = vmatprep.subr.mxu0 0.0
        %586 = vmatpush1.msra.mxu0 0.0
        %587 = vmatprep.subr.mxu0 0.0
        %588 = vmatpush1.msra.mxu0 0.0
        %589 = vmatprep.subr.mxu0 0.0
        %590 = vmatpush1.msra.mxu0 0.0
        %591 = vmatprep.subr.mxu0 0.0
        %592 = vmatpush1.msra.mxu0 0.0
        %593 = vmatprep.subr.mxu0 0.0
        %594 = vmatpush1.msra.mxu0 0.0
        %595 = vmatprep.subr.mxu0 0.0
        %596 = vmatpush1.msra.mxu0 0.0
        %597 = vmatprep.subr.mxu0 0.0
        %598 = vmatpush1.msra.mxu0 0.0
        %599 = vmatprep.subr.mxu0 0.0
        %600 = vmatpush1.msra.mxu0 0.0
        %601 = vmatprep.mubr.f32.mxu0 0.0
        %602 = vmatmul.mubr.f32.gmra.mrb[0].mxu0 %v526
        %v603 = vpop.f32.mrb[0].mxu0
        %v604 = vadd.f32 %v507, %v603
        %v605 = vpop.f32.mrb[0].mxu0
        %606 = vmatprep.mubr.f32.mxu0 0.0
        %607 = vmatmul.mubr.f32.gmra.mrb[0].mxu0 %v529
        %v608 = vpop.f32.mrb[0].mxu0
        %v609 = vadd.f32 %v512, %v608
        %v610 = vpop.f32.mrb[0].mxu0
        %611 = vmatprep.mubr.f32.mxu0 0.0
        %612 = vmatmul.mubr.f32.gmra.mrb[0].mxu0 %v532
        %v613 = vpop.f32.mrb[0].mxu0
        %v614 = vadd.f32 %v517, %v613
        %v615 = vpop.f32.mrb[0].mxu0
        %616 = vmatprep.mubr.f32.mxu0 0.0
        %617 = vmatmul.mubr.f32.gmra.mrb[0].mxu0 %v535
        %v618 = vpop.f32.mrb[0].mxu0
        %v619 = vadd.f32 %v522, %v618
        %v620 = vpop.f32.mrb[0].mxu0
        %621 = vdwg.mxu0
        %v622 = vxor.u32 %v614, 2147483648
        %v623 = vxor.u32 %v619, 2147483648
        %v624 = vmul.f32 %v622, 1.442695
        %v625 = vpow.pop %v624
        %v626 = vmul.f32 %v623, 1.442695
        %v627 = vpow.pop %v626
        %v628 = vadd.f32 %v625, 1.0
        %v629 = vadd.f32 %v627, 1.0
        %v630 = vrcp.pop %v628
        %v631 = vmul.f32 1.0, %v630
        %v632 = vrcp.pop %v629
        %v633 = vmul.f32 1.0, %v632
        %v634 = vmul.f32 %v604, %v631
        %v635 = vmul.f32 %v609, %v633
        %v636 = vld [vmem:[%s5] sm:$0xff]
        %v637 = vld [vmem:[%s5 + $0x8] sm:$0xff]
        %v638 = vld [vmem:[%s5 + $0x10] sm:$0xff]
        %v639 = vld [vmem:[%s5 + $0x18] sm:$0xff]
        %v640 = vld [vmem:[%s5 + $0x20] sm:$0xff]
        %v641 = vld [vmem:[%s5 + $0x28] sm:$0xff]
        %v642 = vld [vmem:[%s5 + $0x30] sm:$0xff]
        %v643 = vld [vmem:[%s5 + $0x38] sm:$0xff]
        %v644 = vld [vmem:[%s6] sm:$0xff]
        %v645 = vld [vmem:[%s6 + $0x8] sm:$0xff]
        %v646 = vld [vmem:[%s6 + $0x10] sm:$0xff]
        %v647 = vld [vmem:[%s6 + $0x18] sm:$0xff]
        %v648 = vld [vmem:[%s6 + $0x20] sm:$0xff]
        %v649 = vld [vmem:[%s6 + $0x28] sm:$0xff]
        %v650 = vld [vmem:[%s6 + $0x30] sm:$0xff]
        %v651 = vld [vmem:[%s6 + $0x38] sm:$0xff]
        %653 = vset.pattern.permute.xlu0 0
        %654 = vperm.xlu0 %653, %v644
        %v655 = vpop.permute.xlu0 %654
        %658 = vset.pattern.permute.xlu0 0
        %659 = vperm.xlu0 %658, %v645
        %v660 = vpop.permute.xlu0 %659
        %663 = vset.pattern.permute.xlu0 0
        %664 = vperm.xlu0 %663, %v646
        %v665 = vpop.permute.xlu0 %664
        %668 = vset.pattern.permute.xlu0 0
        %669 = vperm.xlu0 %668, %v647
        %v670 = vpop.permute.xlu0 %669
        %673 = vset.pattern.permute.xlu0 0
        %674 = vperm.xlu0 %673, %v648
        %v675 = vpop.permute.xlu0 %674
        %678 = vset.pattern.permute.xlu0 0
        %679 = vperm.xlu0 %678, %v649
        %v680 = vpop.permute.xlu0 %679
        %683 = vset.pattern.permute.xlu0 0
        %684 = vperm.xlu0 %683, %v650
        %v685 = vpop.permute.xlu0 %684
        %688 = vset.pattern.permute.xlu0 0
        %689 = vperm.xlu0 %688, %v651
        %v690 = vpop.permute.xlu0 %689
        %vm692 = vcmask 130048
        %v694 = vsel %vm692, %v636, 0
        %v697 = vsel %vm692, %v637, 0
        %v700 = vsel %vm692, %v638, 0
        %v703 = vsel %vm692, %v639, 0
        %v706 = vsel %vm692, %v640, 0
        %v709 = vsel %vm692, %v641, 0
        %v712 = vsel %vm692, %v642, 0
        %v715 = vsel %vm692, %v643, 0
        %717 = vmatprep.subr.mxu0 0.0
        %718 = vmatpush1.msra.mxu0 %v634
        %719 = vmatprep.subr.mxu0 0.0
        %720 = vmatpush1.msra.mxu0 %v635
        %721 = vmatprep.subr.mxu0 0.0
        %722 = vmatpush1.msra.mxu0 0.0
        %723 = vmatprep.subr.mxu0 0.0
        %724 = vmatpush1.msra.mxu0 0.0
        %725 = vmatprep.subr.mxu0 0.0
        %726 = vmatpush1.msra.mxu0 0.0
        %727 = vmatprep.subr.mxu0 0.0
        %728 = vmatpush1.msra.mxu0 0.0
        %729 = vmatprep.subr.mxu0 0.0
        %730 = vmatpush1.msra.mxu0 0.0
        %731 = vmatprep.subr.mxu0 0.0
        %732 = vmatpush1.msra.mxu0 0.0
        %733 = vmatprep.subr.mxu0 0.0
        %734 = vmatpush1.msra.mxu0 0.0
        %735 = vmatprep.subr.mxu0 0.0
        %736 = vmatpush1.msra.mxu0 0.0
        %737 = vmatprep.subr.mxu0 0.0
        %738 = vmatpush1.msra.mxu0 0.0
        %739 = vmatprep.subr.mxu0 0.0
        %740 = vmatpush1.msra.mxu0 0.0
        %741 = vmatprep.subr.mxu0 0.0
        %742 = vmatpush1.msra.mxu0 0.0
        %743 = vmatprep.subr.mxu0 0.0
        %744 = vmatpush1.msra.mxu0 0.0
        %745 = vmatprep.subr.mxu0 0.0
        %746 = vmatpush1.msra.mxu0 0.0
        %747 = vmatprep.subr.mxu0 0.0
        %748 = vmatpush1.msra.mxu0 0.0
        %749 = vmatprep.subr.mxu0 0.0
        %750 = vmatpush1.msra.mxu0 0.0
        %751 = vmatprep.subr.mxu0 0.0
        %752 = vmatpush1.msra.mxu0 0.0
        %753 = vmatprep.subr.mxu0 0.0
        %754 = vmatpush1.msra.mxu0 0.0
        %755 = vmatprep.subr.mxu0 0.0
        %756 = vmatpush1.msra.mxu0 0.0
        %757 = vmatprep.subr.mxu0 0.0
        %758 = vmatpush1.msra.mxu0 0.0
        %759 = vmatprep.subr.mxu0 0.0
        %760 = vmatpush1.msra.mxu0 0.0
        %761 = vmatprep.subr.mxu0 0.0
        %762 = vmatpush1.msra.mxu0 0.0
        %763 = vmatprep.subr.mxu0 0.0
        %764 = vmatpush1.msra.mxu0 0.0
        %765 = vmatprep.subr.mxu0 0.0
        %766 = vmatpush1.msra.mxu0 0.0
        %767 = vmatprep.subr.mxu0 0.0
        %768 = vmatpush1.msra.mxu0 0.0
        %769 = vmatprep.subr.mxu0 0.0
        %770 = vmatpush1.msra.mxu0 0.0
        %771 = vmatprep.subr.mxu0 0.0
        %772 = vmatpush1.msra.mxu0 0.0
        %773 = vmatprep.subr.mxu0 0.0
        %774 = vmatpush1.msra.mxu0 0.0
        %775 = vmatprep.subr.mxu0 0.0
        %776 = vmatpush1.msra.mxu0 0.0
        %777 = vmatprep.subr.mxu0 0.0
        %778 = vmatpush1.msra.mxu0 0.0
        %779 = vmatprep.subr.mxu0 0.0
        %780 = vmatpush1.msra.mxu0 0.0
        %781 = vmatprep.mubr.f32.mxu0 0.0
        %782 = vmatmul.mubr.f32.gmra.mrb[0].mxu0 %v694
        %v783 = vpop.f32.mrb[0].mxu0
        %v784 = vadd.f32 %v655, %v783
        %v785 = vpop.f32.mrb[0].mxu0
        %786 = vmatprep.mubr.f32.mxu0 0.0
        %787 = vmatmul.mubr.f32.gmra.mrb[0].mxu0 %v697
        %v788 = vpop.f32.mrb[0].mxu0
        %v789 = vadd.f32 %v660, %v788
        %v790 = vpop.f32.mrb[0].mxu0
        %791 = vmatprep.mubr.f32.mxu0 0.0
        %792 = vmatmul.mubr.f32.gmra.mrb[0].mxu0 %v700
        %v793 = vpop.f32.mrb[0].mxu0
        %v794 = vadd.f32 %v665, %v793
        %v795 = vpop.f32.mrb[0].mxu0
        %796 = vmatprep.mubr.f32.mxu0 0.0
        %797 = vmatmul.mubr.f32.gmra.mrb[0].mxu0 %v703
        %v798 = vpop.f32.mrb[0].mxu0
        %v799 = vadd.f32 %v670, %v798
        %v800 = vpop.f32.mrb[0].mxu0
        %801 = vmatprep.mubr.f32.mxu0 0.0
        %802 = vmatmul.mubr.f32.gmra.mrb[0].mxu0 %v706
        %v803 = vpop.f32.mrb[0].mxu0
        %v804 = vadd.f32 %v675, %v803
        %v805 = vpop.f32.mrb[0].mxu0
        %806 = vmatprep.mubr.f32.mxu0 0.0
        %807 = vmatmul.mubr.f32.gmra.mrb[0].mxu0 %v709
        %v808 = vpop.f32.mrb[0].mxu0
        %v809 = vadd.f32 %v680, %v808
        %v810 = vpop.f32.mrb[0].mxu0
        %811 = vmatprep.mubr.f32.mxu0 0.0
        %812 = vmatmul.mubr.f32.gmra.mrb[0].mxu0 %v712
        %v813 = vpop.f32.mrb[0].mxu0
        %v814 = vadd.f32 %v685, %v813
        %v815 = vpop.f32.mrb[0].mxu0
        %816 = vmatprep.mubr.f32.mxu0 0.0
        %817 = vmatmul.mubr.f32.gmra.mrb[0].mxu0 %v715
        %v818 = vpop.f32.mrb[0].mxu0
        %v819 = vadd.f32 %v690, %v818
        %v820 = vpop.f32.mrb[0].mxu0
        %821 = vdwg.mxu0
        %v822 = vadd.f32 %v784, %v478
        %v823 = vadd.f32 %v789, %v479
        %v824 = vadd.f32 %v794, %v480
        %v825 = vadd.f32 %v799, %v481
        %v826 = vadd.f32 %v804, 0.0
        %v827 = vadd.f32 %v809, 0.0
        %v828 = vadd.f32 %v814, 0.0
        %v829 = vadd.f32 %v819, 0.0
        %830 = vrot.lane.b32.xlu0 %v822, 2
        %v831 = vpop.permute.xlu0 %830
        %832 = vrot.lane.b32.xlu0 %v823, 2
        %v833 = vpop.permute.xlu0 %832
        %834 = vrot.lane.b32.xlu0 %v824, 2
        %v835 = vpop.permute.xlu0 %834
        %836 = vrot.lane.b32.xlu0 %v825, 2
        %v837 = vpop.permute.xlu0 %836
        %v838 = vsel %vm412, 1, 0
        %vm839 = vcmp.eq.s32.totalorder %v838, 1
        %v840 = vsel %vm839, 0.0, %v831
        %v841 = vsel %vm839, 0.0, %v833
        %v842 = vsel %vm839, 0.0, %v835
        %v843 = vsel %vm839, 0.0, %v837
        %s844 = scalar_lea.vmem %s3, 32
        %v845 = vld [vmem:[%s844] sm:$0xff]
        %v846 = vld [vmem:[%s844 + $0x8] sm:$0xff]
        %v847 = vld [vmem:[%s844 + $0x10] sm:$0xff]
        %v848 = vld [vmem:[%s844 + $0x18] sm:$0xff]
        %s849 = scalar_lea.vmem %s4, 32
        %v850 = vld [vmem:[%s849] sm:$0xff]
        %v851 = vld [vmem:[%s849 + $0x8] sm:$0xff]
        %v852 = vld [vmem:[%s849 + $0x10] sm:$0xff]
        %v853 = vld [vmem:[%s849 + $0x18] sm:$0xff]
        %855 = vset.pattern.permute.xlu0 0
        %856 = vperm.xlu0 %855, %v850
        %v857 = vpop.permute.xlu0 %856
        %860 = vset.pattern.permute.xlu0 0
        %861 = vperm.xlu0 %860, %v851
        %v862 = vpop.permute.xlu0 %861
        %865 = vset.pattern.permute.xlu0 0
        %866 = vperm.xlu0 %865, %v852
        %v867 = vpop.permute.xlu0 %866
        %870 = vset.pattern.permute.xlu0 0
        %871 = vperm.xlu0 %870, %v853
        %v872 = vpop.permute.xlu0 %871
        %v875 = vsel %vm524, %v845, 0
        %v878 = vsel %vm524, %v846, 0
        %v881 = vsel %vm524, %v847, 0
        %v884 = vsel %vm524, %v848, 0
        %886 = vmatprep.subr.mxu0 0.0
        %887 = vmatpush1.msra.mxu0 %v840
        %888 = vmatprep.subr.mxu0 0.0
        %889 = vmatpush1.msra.mxu0 %v841
        %890 = vmatprep.subr.mxu0 0.0
        %891 = vmatpush1.msra.mxu0 %v842
        %892 = vmatprep.subr.mxu0 0.0
        %893 = vmatpush1.msra.mxu0 %v843
        %894 = vmatprep.subr.mxu0 0.0
        %895 = vmatpush1.msra.mxu0 %v822
        %896 = vmatprep.subr.mxu0 0.0
        %897 = vmatpush1.msra.mxu0 %v823
        %898 = vmatprep.subr.mxu0 0.0
        %899 = vmatpush1.msra.mxu0 %v824
        %900 = vmatprep.subr.mxu0 0.0
        %901 = vmatpush1.msra.mxu0 %v825
        %902 = vmatprep.subr.mxu0 0.0
        %903 = vmatpush1.msra.mxu0 0.0
        %904 = vmatprep.subr.mxu0 0.0
        %905 = vmatpush1.msra.mxu0 0.0
        %906 = vmatprep.subr.mxu0 0.0
        %907 = vmatpush1.msra.mxu0 0.0
        %908 = vmatprep.subr.mxu0 0.0
        %909 = vmatpush1.msra.mxu0 0.0
        %910 = vmatprep.subr.mxu0 0.0
        %911 = vmatpush1.msra.mxu0 0.0
        %912 = vmatprep.subr.mxu0 0.0
        %913 = vmatpush1.msra.mxu0 0.0
        %914 = vmatprep.subr.mxu0 0.0
        %915 = vmatpush1.msra.mxu0 0.0
        %916 = vmatprep.subr.mxu0 0.0
        %917 = vmatpush1.msra.mxu0 0.0
        %918 = vmatprep.subr.mxu0 0.0
        %919 = vmatpush1.msra.mxu0 0.0
        %920 = vmatprep.subr.mxu0 0.0
        %921 = vmatpush1.msra.mxu0 0.0
        %922 = vmatprep.subr.mxu0 0.0
        %923 = vmatpush1.msra.mxu0 0.0
        %924 = vmatprep.subr.mxu0 0.0
        %925 = vmatpush1.msra.mxu0 0.0
        %926 = vmatprep.subr.mxu0 0.0
        %927 = vmatpush1.msra.mxu0 0.0
        %928 = vmatprep.subr.mxu0 0.0
        %929 = vmatpush1.msra.mxu0 0.0
        %930 = vmatprep.subr.mxu0 0.0
        %931 = vmatpush1.msra.mxu0 0.0
        %932 = vmatprep.subr.mxu0 0.0
        %933 = vmatpush1.msra.mxu0 0.0
        %934 = vmatprep.subr.mxu0 0.0
        %935 = vmatpush1.msra.mxu0 0.0
        %936 = vmatprep.subr.mxu0 0.0
        %937 = vmatpush1.msra.mxu0 0.0
        %938 = vmatprep.subr.mxu0 0.0
        %939 = vmatpush1.msra.mxu0 0.0
        %940 = vmatprep.subr.mxu0 0.0
        %941 = vmatpush1.msra.mxu0 0.0
        %942 = vmatprep.subr.mxu0 0.0
        %943 = vmatpush1.msra.mxu0 0.0
        %944 = vmatprep.subr.mxu0 0.0
        %945 = vmatpush1.msra.mxu0 0.0
        %946 = vmatprep.subr.mxu0 0.0
        %947 = vmatpush1.msra.mxu0 0.0
        %948 = vmatprep.subr.mxu0 0.0
        %949 = vmatpush1.msra.mxu0 0.0
        %950 = vmatprep.mubr.f32.mxu0 0.0
        %951 = vmatmul.mubr.f32.gmra.mrb[0].mxu0 %v875
        %v952 = vpop.f32.mrb[0].mxu0
        %v953 = vadd.f32 %v857, %v952
        %v954 = vpop.f32.mrb[0].mxu0
        %955 = vmatprep.mubr.f32.mxu0 0.0
        %956 = vmatmul.mubr.f32.gmra.mrb[0].mxu0 %v878
        %v957 = vpop.f32.mrb[0].mxu0
        %v958 = vadd.f32 %v862, %v957
        %v959 = vpop.f32.mrb[0].mxu0
        %960 = vmatprep.mubr.f32.mxu0 0.0
        %961 = vmatmul.mubr.f32.gmra.mrb[0].mxu0 %v881
        %v962 = vpop.f32.mrb[0].mxu0
        %v963 = vadd.f32 %v867, %v962
        %v964 = vpop.f32.mrb[0].mxu0
        %965 = vmatprep.mubr.f32.mxu0 0.0
        %966 = vmatmul.mubr.f32.gmra.mrb[0].mxu0 %v884
        %v967 = vpop.f32.mrb[0].mxu0
        %v968 = vadd.f32 %v872, %v967
        %v969 = vpop.f32.mrb[0].mxu0
        %970 = vdwg.mxu0
        %v971 = vxor.u32 %v963, 2147483648
        %v972 = vxor.u32 %v968, 2147483648
        %v973 = vmul.f32 %v971, 1.442695
        %v974 = vpow.pop %v973
        %v975 = vmul.f32 %v972, 1.442695
        %v976 = vpow.pop %v975
        %v977 = vadd.f32 %v974, 1.0
        %v978 = vadd.f32 %v976, 1.0
        %v979 = vrcp.pop %v977
        %v980 = vmul.f32 1.0, %v979
        %v981 = vrcp.pop %v978
        %v982 = vmul.f32 1.0, %v981
        %v983 = vmul.f32 %v953, %v980
        %v984 = vmul.f32 %v958, %v982
        %s985 = scalar_lea.vmem %s5, 64
        %v986 = vld [vmem:[%s985] sm:$0xff]
        %v987 = vld [vmem:[%s985 + $0x8] sm:$0xff]
        %v988 = vld [vmem:[%s985 + $0x10] sm:$0xff]
        %v989 = vld [vmem:[%s985 + $0x18] sm:$0xff]
        %v990 = vld [vmem:[%s985 + $0x20] sm:$0xff]
        %v991 = vld [vmem:[%s985 + $0x28] sm:$0xff]
        %v992 = vld [vmem:[%s985 + $0x30] sm:$0xff]
        %v993 = vld [vmem:[%s985 + $0x38] sm:$0xff]
        %s994 = scalar_lea.vmem %s6, 64
        %v995 = vld [vmem:[%s994] sm:$0xff]
        %v996 = vld [vmem:[%s994 + $0x8] sm:$0xff]
        %v997 = vld [vmem:[%s994 + $0x10] sm:$0xff]
        %v998 = vld [vmem:[%s994 + $0x18] sm:$0xff]
        %v999 = vld [vmem:[%s994 + $0x20] sm:$0xff]
        %v1000 = vld [vmem:[%s994 + $0x28] sm:$0xff]
        %v1001 = vld [vmem:[%s994 + $0x30] sm:$0xff]
        %v1002 = vld [vmem:[%s994 + $0x38] sm:$0xff]
        %1004 = vset.pattern.permute.xlu0 0
        %1005 = vperm.xlu0 %1004, %v995
        %v1006 = vpop.permute.xlu0 %1005
        %1009 = vset.pattern.permute.xlu0 0
        %1010 = vperm.xlu0 %1009, %v996
        %v1011 = vpop.permute.xlu0 %1010
        %1014 = vset.pattern.permute.xlu0 0
        %1015 = vperm.xlu0 %1014, %v997
        %v1016 = vpop.permute.xlu0 %1015
        %1019 = vset.pattern.permute.xlu0 0
        %1020 = vperm.xlu0 %1019, %v998
        %v1021 = vpop.permute.xlu0 %1020
        %1024 = vset.pattern.permute.xlu0 0
        %1025 = vperm.xlu0 %1024, %v999
        %v1026 = vpop.permute.xlu0 %1025
        %1029 = vset.pattern.permute.xlu0 0
        %1030 = vperm.xlu0 %1029, %v1000
        %v1031 = vpop.permute.xlu0 %1030
        %1034 = vset.pattern.permute.xlu0 0
        %1035 = vperm.xlu0 %1034, %v1001
        %v1036 = vpop.permute.xlu0 %1035
        %1039 = vset.pattern.permute.xlu0 0
        %1040 = vperm.xlu0 %1039, %v1002
        %v1041 = vpop.permute.xlu0 %1040
        %v1044 = vsel %vm692, %v986, 0
        %v1047 = vsel %vm692, %v987, 0
        %v1050 = vsel %vm692, %v988, 0
        %v1053 = vsel %vm692, %v989, 0
        %v1056 = vsel %vm692, %v990, 0
        %v1059 = vsel %vm692, %v991, 0
        %v1062 = vsel %vm692, %v992, 0
        %v1065 = vsel %vm692, %v993, 0
        %1067 = vmatprep.subr.mxu0 0.0
        %1068 = vmatpush1.msra.mxu0 %v983
        %1069 = vmatprep.subr.mxu0 0.0
        %1070 = vmatpush1.msra.mxu0 %v984
        %1071 = vmatprep.subr.mxu0 0.0
        %1072 = vmatpush1.msra.mxu0 0.0
        %1073 = vmatprep.subr.mxu0 0.0
        %1074 = vmatpush1.msra.mxu0 0.0
        %1075 = vmatprep.subr.mxu0 0.0
        %1076 = vmatpush1.msra.mxu0 0.0
        %1077 = vmatprep.subr.mxu0 0.0
        %1078 = vmatpush1.msra.mxu0 0.0
        %1079 = vmatprep.subr.mxu0 0.0
        %1080 = vmatpush1.msra.mxu0 0.0
        %1081 = vmatprep.subr.mxu0 0.0
        %1082 = vmatpush1.msra.mxu0 0.0
        %1083 = vmatprep.subr.mxu0 0.0
        %1084 = vmatpush1.msra.mxu0 0.0
        %1085 = vmatprep.subr.mxu0 0.0
        %1086 = vmatpush1.msra.mxu0 0.0
        %1087 = vmatprep.subr.mxu0 0.0
        %1088 = vmatpush1.msra.mxu0 0.0
        %1089 = vmatprep.subr.mxu0 0.0
        %1090 = vmatpush1.msra.mxu0 0.0
        %1091 = vmatprep.subr.mxu0 0.0
        %1092 = vmatpush1.msra.mxu0 0.0
        %1093 = vmatprep.subr.mxu0 0.0
        %1094 = vmatpush1.msra.mxu0 0.0
        %1095 = vmatprep.subr.mxu0 0.0
        %1096 = vmatpush1.msra.mxu0 0.0
        %1097 = vmatprep.subr.mxu0 0.0
        %1098 = vmatpush1.msra.mxu0 0.0
        %1099 = vmatprep.subr.mxu0 0.0
        %1100 = vmatpush1.msra.mxu0 0.0
        %1101 = vmatprep.subr.mxu0 0.0
        %1102 = vmatpush1.msra.mxu0 0.0
        %1103 = vmatprep.subr.mxu0 0.0
        %1104 = vmatpush1.msra.mxu0 0.0
        %1105 = vmatprep.subr.mxu0 0.0
        %1106 = vmatpush1.msra.mxu0 0.0
        %1107 = vmatprep.subr.mxu0 0.0
        %1108 = vmatpush1.msra.mxu0 0.0
        %1109 = vmatprep.subr.mxu0 0.0
        %1110 = vmatpush1.msra.mxu0 0.0
        %1111 = vmatprep.subr.mxu0 0.0
        %1112 = vmatpush1.msra.mxu0 0.0
        %1113 = vmatprep.subr.mxu0 0.0
        %1114 = vmatpush1.msra.mxu0 0.0
        %1115 = vmatprep.subr.mxu0 0.0
        %1116 = vmatpush1.msra.mxu0 0.0
        %1117 = vmatprep.subr.mxu0 0.0
        %1118 = vmatpush1.msra.mxu0 0.0
        %1119 = vmatprep.subr.mxu0 0.0
        %1120 = vmatpush1.msra.mxu0 0.0
        %1121 = vmatprep.subr.mxu0 0.0
        %1122 = vmatpush1.msra.mxu0 0.0
        %1123 = vmatprep.subr.mxu0 0.0
        %1124 = vmatpush1.msra.mxu0 0.0
        %1125 = vmatprep.subr.mxu0 0.0
        %1126 = vmatpush1.msra.mxu0 0.0
        %1127 = vmatprep.subr.mxu0 0.0
        %1128 = vmatpush1.msra.mxu0 0.0
        %1129 = vmatprep.subr.mxu0 0.0
        %1130 = vmatpush1.msra.mxu0 0.0
        %1131 = vmatprep.mubr.f32.mxu0 0.0
        %1132 = vmatmul.mubr.f32.gmra.mrb[0].mxu0 %v1044
        %v1133 = vpop.f32.mrb[0].mxu0
        %v1134 = vadd.f32 %v1006, %v1133
        %v1135 = vpop.f32.mrb[0].mxu0
        %1136 = vmatprep.mubr.f32.mxu0 0.0
        %1137 = vmatmul.mubr.f32.gmra.mrb[0].mxu0 %v1047
        %v1138 = vpop.f32.mrb[0].mxu0
        %v1139 = vadd.f32 %v1011, %v1138
        %v1140 = vpop.f32.mrb[0].mxu0
        %1141 = vmatprep.mubr.f32.mxu0 0.0
        %1142 = vmatmul.mubr.f32.gmra.mrb[0].mxu0 %v1050
        %v1143 = vpop.f32.mrb[0].mxu0
        %v1144 = vadd.f32 %v1016, %v1143
        %v1145 = vpop.f32.mrb[0].mxu0
        %1146 = vmatprep.mubr.f32.mxu0 0.0
        %1147 = vmatmul.mubr.f32.gmra.mrb[0].mxu0 %v1053
        %v1148 = vpop.f32.mrb[0].mxu0
        %v1149 = vadd.f32 %v1021, %v1148
        %v1150 = vpop.f32.mrb[0].mxu0
        %1151 = vmatprep.mubr.f32.mxu0 0.0
        %1152 = vmatmul.mubr.f32.gmra.mrb[0].mxu0 %v1056
        %v1153 = vpop.f32.mrb[0].mxu0
        %v1154 = vadd.f32 %v1026, %v1153
        %v1155 = vpop.f32.mrb[0].mxu0
        %1156 = vmatprep.mubr.f32.mxu0 0.0
        %1157 = vmatmul.mubr.f32.gmra.mrb[0].mxu0 %v1059
        %v1158 = vpop.f32.mrb[0].mxu0
        %v1159 = vadd.f32 %v1031, %v1158
        %v1160 = vpop.f32.mrb[0].mxu0
        %1161 = vmatprep.mubr.f32.mxu0 0.0
        %1162 = vmatmul.mubr.f32.gmra.mrb[0].mxu0 %v1062
        %v1163 = vpop.f32.mrb[0].mxu0
        %v1164 = vadd.f32 %v1036, %v1163
        %v1165 = vpop.f32.mrb[0].mxu0
        %1166 = vmatprep.mubr.f32.mxu0 0.0
        %1167 = vmatmul.mubr.f32.gmra.mrb[0].mxu0 %v1065
        %v1168 = vpop.f32.mrb[0].mxu0
        %v1169 = vadd.f32 %v1041, %v1168
        %v1170 = vpop.f32.mrb[0].mxu0
        %1171 = vdwg.mxu0
        %v1172 = vadd.f32 %v1134, %v822
        %v1173 = vadd.f32 %v1139, %v823
        %v1174 = vadd.f32 %v1144, %v824
        %v1175 = vadd.f32 %v1149, %v825
        %v1176 = vadd.f32 %v826, %v1154
        %v1177 = vadd.f32 %v827, %v1159
        %v1178 = vadd.f32 %v828, %v1164
        %v1179 = vadd.f32 %v829, %v1169
        %1180 = vrot.lane.b32.xlu0 %v1172, 4
        %v1181 = vpop.permute.xlu0 %1180
        %1182 = vrot.lane.b32.xlu0 %v1173, 4
        %v1183 = vpop.permute.xlu0 %1182
        %1184 = vrot.lane.b32.xlu0 %v1174, 4
        %v1185 = vpop.permute.xlu0 %1184
        %1186 = vrot.lane.b32.xlu0 %v1175, 4
        %v1187 = vpop.permute.xlu0 %1186
        %vm1188 = vcmp.lt.s32.totalorder %v380, 4
        %v1189 = vsel %vm1188, 1, 0
        %vm1190 = vcmp.eq.s32.totalorder %v1189, 1
        %v1191 = vsel %vm1190, 0.0, %v1181
        %v1192 = vsel %vm1190, 0.0, %v1183
        %v1193 = vsel %vm1190, 0.0, %v1185
        %v1194 = vsel %vm1190, 0.0, %v1187
        %s1195 = scalar_lea.vmem %s3, 64
        %v1196 = vld [vmem:[%s1195] sm:$0xff]
        %v1197 = vld [vmem:[%s1195 + $0x8] sm:$0xff]
        %v1198 = vld [vmem:[%s1195 + $0x10] sm:$0xff]
        %v1199 = vld [vmem:[%s1195 + $0x18] sm:$0xff]
        %s1200 = scalar_lea.vmem %s4, 64
        %v1201 = vld [vmem:[%s1200] sm:$0xff]
        %v1202 = vld [vmem:[%s1200 + $0x8] sm:$0xff]
        %v1203 = vld [vmem:[%s1200 + $0x10] sm:$0xff]
        %v1204 = vld [vmem:[%s1200 + $0x18] sm:$0xff]
        %1206 = vset.pattern.permute.xlu0 0
        %1207 = vperm.xlu0 %1206, %v1201
        %v1208 = vpop.permute.xlu0 %1207
        %1211 = vset.pattern.permute.xlu0 0
        %1212 = vperm.xlu0 %1211, %v1202
        %v1213 = vpop.permute.xlu0 %1212
        %1216 = vset.pattern.permute.xlu0 0
        %1217 = vperm.xlu0 %1216, %v1203
        %v1218 = vpop.permute.xlu0 %1217
        %1221 = vset.pattern.permute.xlu0 0
        %1222 = vperm.xlu0 %1221, %v1204
        %v1223 = vpop.permute.xlu0 %1222
        %v1226 = vsel %vm524, %v1196, 0
        %v1229 = vsel %vm524, %v1197, 0
        %v1232 = vsel %vm524, %v1198, 0
        %v1235 = vsel %vm524, %v1199, 0
        %1237 = vmatprep.subr.mxu0 0.0
        %1238 = vmatpush1.msra.mxu0 %v1191
        %1239 = vmatprep.subr.mxu0 0.0
        %1240 = vmatpush1.msra.mxu0 %v1192
        %1241 = vmatprep.subr.mxu0 0.0
        %1242 = vmatpush1.msra.mxu0 %v1193
        %1243 = vmatprep.subr.mxu0 0.0
        %1244 = vmatpush1.msra.mxu0 %v1194
        %1245 = vmatprep.subr.mxu0 0.0
        %1246 = vmatpush1.msra.mxu0 %v1172
        %1247 = vmatprep.subr.mxu0 0.0
        %1248 = vmatpush1.msra.mxu0 %v1173
        %1249 = vmatprep.subr.mxu0 0.0
        %1250 = vmatpush1.msra.mxu0 %v1174
        %1251 = vmatprep.subr.mxu0 0.0
        %1252 = vmatpush1.msra.mxu0 %v1175
        %1253 = vmatprep.subr.mxu0 0.0
        %1254 = vmatpush1.msra.mxu0 0.0
        %1255 = vmatprep.subr.mxu0 0.0
        %1256 = vmatpush1.msra.mxu0 0.0
        %1257 = vmatprep.subr.mxu0 0.0
        %1258 = vmatpush1.msra.mxu0 0.0
        %1259 = vmatprep.subr.mxu0 0.0
        %1260 = vmatpush1.msra.mxu0 0.0
        %1261 = vmatprep.subr.mxu0 0.0
        %1262 = vmatpush1.msra.mxu0 0.0
        %1263 = vmatprep.subr.mxu0 0.0
        %1264 = vmatpush1.msra.mxu0 0.0
        %1265 = vmatprep.subr.mxu0 0.0
        %1266 = vmatpush1.msra.mxu0 0.0
        %1267 = vmatprep.subr.mxu0 0.0
        %1268 = vmatpush1.msra.mxu0 0.0
        %1269 = vmatprep.subr.mxu0 0.0
        %1270 = vmatpush1.msra.mxu0 0.0
        %1271 = vmatprep.subr.mxu0 0.0
        %1272 = vmatpush1.msra.mxu0 0.0
        %1273 = vmatprep.subr.mxu0 0.0
        %1274 = vmatpush1.msra.mxu0 0.0
        %1275 = vmatprep.subr.mxu0 0.0
        %1276 = vmatpush1.msra.mxu0 0.0
        %1277 = vmatprep.subr.mxu0 0.0
        %1278 = vmatpush1.msra.mxu0 0.0
        %1279 = vmatprep.subr.mxu0 0.0
        %1280 = vmatpush1.msra.mxu0 0.0
        %1281 = vmatprep.subr.mxu0 0.0
        %1282 = vmatpush1.msra.mxu0 0.0
        %1283 = vmatprep.subr.mxu0 0.0
        %1284 = vmatpush1.msra.mxu0 0.0
        %1285 = vmatprep.subr.mxu0 0.0
        %1286 = vmatpush1.msra.mxu0 0.0
        %1287 = vmatprep.subr.mxu0 0.0
        %1288 = vmatpush1.msra.mxu0 0.0
        %1289 = vmatprep.subr.mxu0 0.0
        %1290 = vmatpush1.msra.mxu0 0.0
        %1291 = vmatprep.subr.mxu0 0.0
        %1292 = vmatpush1.msra.mxu0 0.0
        %1293 = vmatprep.subr.mxu0 0.0
        %1294 = vmatpush1.msra.mxu0 0.0
        %1295 = vmatprep.subr.mxu0 0.0
        %1296 = vmatpush1.msra.mxu0 0.0
        %1297 = vmatprep.subr.mxu0 0.0
        %1298 = vmatpush1.msra.mxu0 0.0
        %1299 = vmatprep.subr.mxu0 0.0
        %1300 = vmatpush1.msra.mxu0 0.0
        %1301 = vmatprep.mubr.f32.mxu0 0.0
        %1302 = vmatmul.mubr.f32.gmra.mrb[0].mxu0 %v1226
        %v1303 = vpop.f32.mrb[0].mxu0
        %v1304 = vadd.f32 %v1208, %v1303
        %v1305 = vpop.f32.mrb[0].mxu0
        %1306 = vmatprep.mubr.f32.mxu0 0.0
        %1307 = vmatmul.mubr.f32.gmra.mrb[0].mxu0 %v1229
        %v1308 = vpop.f32.mrb[0].mxu0
        %v1309 = vadd.f32 %v1213, %v1308
        %v1310 = vpop.f32.mrb[0].mxu0
        %1311 = vmatprep.mubr.f32.mxu0 0.0
        %1312 = vmatmul.mubr.f32.gmra.mrb[0].mxu0 %v1232
        %v1313 = vpop.f32.mrb[0].mxu0
        %v1314 = vadd.f32 %v1218, %v1313
        %v1315 = vpop.f32.mrb[0].mxu0
        %1316 = vmatprep.mubr.f32.mxu0 0.0
        %1317 = vmatmul.mubr.f32.gmra.mrb[0].mxu0 %v1235
        %v1318 = vpop.f32.mrb[0].mxu0
        %v1319 = vadd.f32 %v1223, %v1318
        %v1320 = vpop.f32.mrb[0].mxu0
        %1321 = vdwg.mxu0
        %v1322 = vxor.u32 %v1314, 2147483648
        %v1323 = vxor.u32 %v1319, 2147483648
        %v1324 = vmul.f32 %v1322, 1.442695
        %v1325 = vpow.pop %v1324
        %v1326 = vmul.f32 %v1323, 1.442695
        %v1327 = vpow.pop %v1326
        %v1328 = vadd.f32 %v1325, 1.0
        %v1329 = vadd.f32 %v1327, 1.0
        %v1330 = vrcp.pop %v1328
        %v1331 = vmul.f32 1.0, %v1330
        %v1332 = vrcp.pop %v1329
        %v1333 = vmul.f32 1.0, %v1332
        %v1334 = vmul.f32 %v1304, %v1331
        %v1335 = vmul.f32 %v1309, %v1333
        %s1336 = scalar_lea.vmem %s5, 128
        %v1337 = vld [vmem:[%s1336] sm:$0xff]
        %v1338 = vld [vmem:[%s1336 + $0x8] sm:$0xff]
        %v1339 = vld [vmem:[%s1336 + $0x10] sm:$0xff]
        %v1340 = vld [vmem:[%s1336 + $0x18] sm:$0xff]
        %v1341 = vld [vmem:[%s1336 + $0x20] sm:$0xff]
        %v1342 = vld [vmem:[%s1336 + $0x28] sm:$0xff]
        %v1343 = vld [vmem:[%s1336 + $0x30] sm:$0xff]
        %v1344 = vld [vmem:[%s1336 + $0x38] sm:$0xff]
        %s1345 = scalar_lea.vmem %s6, 128
        %v1346 = vld [vmem:[%s1345] sm:$0xff]
        %v1347 = vld [vmem:[%s1345 + $0x8] sm:$0xff]
        %v1348 = vld [vmem:[%s1345 + $0x10] sm:$0xff]
        %v1349 = vld [vmem:[%s1345 + $0x18] sm:$0xff]
        %v1350 = vld [vmem:[%s1345 + $0x20] sm:$0xff]
        %v1351 = vld [vmem:[%s1345 + $0x28] sm:$0xff]
        %v1352 = vld [vmem:[%s1345 + $0x30] sm:$0xff]
        %v1353 = vld [vmem:[%s1345 + $0x38] sm:$0xff]
        %1355 = vset.pattern.permute.xlu0 0
        %1356 = vperm.xlu0 %1355, %v1346
        %v1357 = vpop.permute.xlu0 %1356
        %1359 = vset.pattern.permute.xlu0 0
        %1360 = vperm.xlu0 %1359, %v1347
        %v1361 = vpop.permute.xlu0 %1360
        %1363 = vset.pattern.permute.xlu0 0
        %1364 = vperm.xlu0 %1363, %v1348
        %v1365 = vpop.permute.xlu0 %1364
        %1367 = vset.pattern.permute.xlu0 0
        %1368 = vperm.xlu0 %1367, %v1349
        %v1369 = vpop.permute.xlu0 %1368
        %1371 = vset.pattern.permute.xlu0 0
        %1372 = vperm.xlu0 %1371, %v1350
        %v1373 = vpop.permute.xlu0 %1372
        %1376 = vset.pattern.permute.xlu0 0
        %1377 = vperm.xlu0 %1376, %v1351
        %v1378 = vpop.permute.xlu0 %1377
        %1381 = vset.pattern.permute.xlu0 0
        %1382 = vperm.xlu0 %1381, %v1352
        %v1383 = vpop.permute.xlu0 %1382
        %1386 = vset.pattern.permute.xlu0 0
        %1387 = vperm.xlu0 %1386, %v1353
        %v1388 = vpop.permute.xlu0 %1387
        %v1391 = vsel %vm692, %v1337, 0
        %v1394 = vsel %vm692, %v1338, 0
        %v1397 = vsel %vm692, %v1339, 0
        %v1400 = vsel %vm692, %v1340, 0
        %v1403 = vsel %vm692, %v1341, 0
        %v1406 = vsel %vm692, %v1342, 0
        %v1409 = vsel %vm692, %v1343, 0
        %v1412 = vsel %vm692, %v1344, 0
        %1414 = vmatprep.subr.mxu0 0.0
        %1415 = vmatpush1.msra.mxu0 %v1334
        %1416 = vmatprep.subr.mxu0 0.0
        %1417 = vmatpush1.msra.mxu0 %v1335
        %1418 = vmatprep.subr.mxu0 0.0
        %1419 = vmatpush1.msra.mxu0 0.0
        %1420 = vmatprep.subr.mxu0 0.0
        %1421 = vmatpush1.msra.mxu0 0.0
        %1422 = vmatprep.subr.mxu0 0.0
        %1423 = vmatpush1.msra.mxu0 0.0
        %1424 = vmatprep.subr.mxu0 0.0
        %1425 = vmatpush1.msra.mxu0 0.0
        %1426 = vmatprep.subr.mxu0 0.0
        %1427 = vmatpush1.msra.mxu0 0.0
        %1428 = vmatprep.subr.mxu0 0.0
        %1429 = vmatpush1.msra.mxu0 0.0
        %1430 = vmatprep.subr.mxu0 0.0
        %1431 = vmatpush1.msra.mxu0 0.0
        %1432 = vmatprep.subr.mxu0 0.0
        %1433 = vmatpush1.msra.mxu0 0.0
        %1434 = vmatprep.subr.mxu0 0.0
        %1435 = vmatpush1.msra.mxu0 0.0
        %1436 = vmatprep.subr.mxu0 0.0
        %1437 = vmatpush1.msra.mxu0 0.0
        %1438 = vmatprep.subr.mxu0 0.0
        %1439 = vmatpush1.msra.mxu0 0.0
        %1440 = vmatprep.subr.mxu0 0.0
        %1441 = vmatpush1.msra.mxu0 0.0
        %1442 = vmatprep.subr.mxu0 0.0
        %1443 = vmatpush1.msra.mxu0 0.0
        %1444 = vmatprep.subr.mxu0 0.0
        %1445 = vmatpush1.msra.mxu0 0.0
        %1446 = vmatprep.subr.mxu0 0.0
        %1447 = vmatpush1.msra.mxu0 0.0
        %1448 = vmatprep.subr.mxu0 0.0
        %1449 = vmatpush1.msra.mxu0 0.0
        %1450 = vmatprep.subr.mxu0 0.0
        %1451 = vmatpush1.msra.mxu0 0.0
        %1452 = vmatprep.subr.mxu0 0.0
        %1453 = vmatpush1.msra.mxu0 0.0
        %1454 = vmatprep.subr.mxu0 0.0
        %1455 = vmatpush1.msra.mxu0 0.0
        %1456 = vmatprep.subr.mxu0 0.0
        %1457 = vmatpush1.msra.mxu0 0.0
        %1458 = vmatprep.subr.mxu0 0.0
        %1459 = vmatpush1.msra.mxu0 0.0
        %1460 = vmatprep.subr.mxu0 0.0
        %1461 = vmatpush1.msra.mxu0 0.0
        %1462 = vmatprep.subr.mxu0 0.0
        %1463 = vmatpush1.msra.mxu0 0.0
        %1464 = vmatprep.subr.mxu0 0.0
        %1465 = vmatpush1.msra.mxu0 0.0
        %1466 = vmatprep.subr.mxu0 0.0
        %1467 = vmatpush1.msra.mxu0 0.0
        %1468 = vmatprep.subr.mxu0 0.0
        %1469 = vmatpush1.msra.mxu0 0.0
        %1470 = vmatprep.subr.mxu0 0.0
        %1471 = vmatpush1.msra.mxu0 0.0
        %1472 = vmatprep.subr.mxu0 0.0
        %1473 = vmatpush1.msra.mxu0 0.0
        %1474 = vmatprep.subr.mxu0 0.0
        %1475 = vmatpush1.msra.mxu0 0.0
        %1476 = vmatprep.subr.mxu0 0.0
        %1477 = vmatpush1.msra.mxu0 0.0
        %1478 = vmatprep.mubr.f32.mxu0 0.0
        %1479 = vmatmul.mubr.f32.gmra.mrb[0].mxu0 %v1391
        %v1480 = vpop.f32.mrb[0].mxu0
        %v1481 = vpop.f32.mrb[0].mxu0
        %1482 = vmatprep.mubr.f32.mxu0 0.0
        %1483 = vmatmul.mubr.f32.gmra.mrb[0].mxu0 %v1394
        %v1484 = vpop.f32.mrb[0].mxu0
        %v1485 = vpop.f32.mrb[0].mxu0
        %1486 = vmatprep.mubr.f32.mxu0 0.0
        %1487 = vmatmul.mubr.f32.gmra.mrb[0].mxu0 %v1397
        %v1488 = vpop.f32.mrb[0].mxu0
        %v1489 = vpop.f32.mrb[0].mxu0
        %1490 = vmatprep.mubr.f32.mxu0 0.0
        %1491 = vmatmul.mubr.f32.gmra.mrb[0].mxu0 %v1400
        %v1492 = vpop.f32.mrb[0].mxu0
        %v1493 = vpop.f32.mrb[0].mxu0
        %1494 = vmatprep.mubr.f32.mxu0 0.0
        %1495 = vmatmul.mubr.f32.gmra.mrb[0].mxu0 %v1403
        %v1496 = vpop.f32.mrb[0].mxu0
        %v1497 = vadd.f32 %v1373, %v1496
        %v1498 = vpop.f32.mrb[0].mxu0
        %1499 = vmatprep.mubr.f32.mxu0 0.0
        %1500 = vmatmul.mubr.f32.gmra.mrb[0].mxu0 %v1406
        %v1501 = vpop.f32.mrb[0].mxu0
        %v1502 = vadd.f32 %v1378, %v1501
        %v1503 = vpop.f32.mrb[0].mxu0
        %1504 = vmatprep.mubr.f32.mxu0 0.0
        %1505 = vmatmul.mubr.f32.gmra.mrb[0].mxu0 %v1409
        %v1506 = vpop.f32.mrb[0].mxu0
        %v1507 = vadd.f32 %v1383, %v1506
        %v1508 = vpop.f32.mrb[0].mxu0
        %1509 = vmatprep.mubr.f32.mxu0 0.0
        %1510 = vmatmul.mubr.f32.gmra.mrb[0].mxu0 %v1412
        %v1511 = vpop.f32.mrb[0].mxu0
        %v1512 = vadd.f32 %v1388, %v1511
        %v1513 = vpop.f32.mrb[0].mxu0
        %1514 = vdwg.mxu0
        %v1515 = vadd.f32 %v1176, %v1497
        %v1516 = vadd.f32 %v1177, %v1502
        %v1517 = vadd.f32 %v1178, %v1507
        %v1518 = vadd.f32 %v1179, %v1512
        %v1519 = vmax.f32 %v1515, 0.0
        %v1520 = vmax.f32 %v1516, 0.0
        %v1521 = vmax.f32 %v1517, 0.0
        %v1522 = vmax.f32 %v1518, 0.0
        %v1523 = vld [vmem:[%s7] sm:$0xff]
        %v1524 = vld [vmem:[%s7 + $0x8] sm:$0xff]
        %v1525 = vld [vmem:[%s7 + $0x10] sm:$0xff]
        %v1526 = vld [vmem:[%s7 + $0x18] sm:$0xff]
        %v1527 = vld [vmem:[%s8] sm:$0xff]
        %v1528 = vld [vmem:[%s8 + $0x8] sm:$0xff]
        %v1529 = vld [vmem:[%s8 + $0x10] sm:$0xff]
        %v1530 = vld [vmem:[%s8 + $0x18] sm:$0xff]
        %1532 = vset.pattern.permute.xlu0 0
        %1533 = vperm.xlu0 %1532, %v1527
        %v1534 = vpop.permute.xlu0 %1533
        %1537 = vset.pattern.permute.xlu0 0
        %1538 = vperm.xlu0 %1537, %v1528
        %v1539 = vpop.permute.xlu0 %1538
        %1542 = vset.pattern.permute.xlu0 0
        %1543 = vperm.xlu0 %1542, %v1529
        %v1544 = vpop.permute.xlu0 %1543
        %1547 = vset.pattern.permute.xlu0 0
        %1548 = vperm.xlu0 %1547, %v1530
        %v1549 = vpop.permute.xlu0 %1548
        %vm1551 = vcmask 261120
        %v1553 = vsel %vm1551, %v1523, 0
        %v1556 = vsel %vm1551, %v1524, 0
        %v1559 = vsel %vm1551, %v1525, 0
        %v1562 = vsel %vm1551, %v1526, 0
        %1564 = vmatprep.subr.mxu0 0.0
        %1565 = vmatpush1.msra.mxu0 %v1519
        %1566 = vmatprep.subr.mxu0 0.0
        %1567 = vmatpush1.msra.mxu0 %v1520
        %1568 = vmatprep.subr.mxu0 0.0
        %1569 = vmatpush1.msra.mxu0 %v1521
        %1570 = vmatprep.subr.mxu0 0.0
        %1571 = vmatpush1.msra.mxu0 %v1522
        %1572 = vmatprep.subr.mxu0 0.0
        %1573 = vmatpush1.msra.mxu0 0.0
        %1574 = vmatprep.subr.mxu0 0.0
        %1575 = vmatpush1.msra.mxu0 0.0
        %1576 = vmatprep.subr.mxu0 0.0
        %1577 = vmatpush1.msra.mxu0 0.0
        %1578 = vmatprep.subr.mxu0 0.0
        %1579 = vmatpush1.msra.mxu0 0.0
        %1580 = vmatprep.subr.mxu0 0.0
        %1581 = vmatpush1.msra.mxu0 0.0
        %1582 = vmatprep.subr.mxu0 0.0
        %1583 = vmatpush1.msra.mxu0 0.0
        %1584 = vmatprep.subr.mxu0 0.0
        %1585 = vmatpush1.msra.mxu0 0.0
        %1586 = vmatprep.subr.mxu0 0.0
        %1587 = vmatpush1.msra.mxu0 0.0
        %1588 = vmatprep.subr.mxu0 0.0
        %1589 = vmatpush1.msra.mxu0 0.0
        %1590 = vmatprep.subr.mxu0 0.0
        %1591 = vmatpush1.msra.mxu0 0.0
        %1592 = vmatprep.subr.mxu0 0.0
        %1593 = vmatpush1.msra.mxu0 0.0
        %1594 = vmatprep.subr.mxu0 0.0
        %1595 = vmatpush1.msra.mxu0 0.0
        %1596 = vmatprep.subr.mxu0 0.0
        %1597 = vmatpush1.msra.mxu0 0.0
        %1598 = vmatprep.subr.mxu0 0.0
        %1599 = vmatpush1.msra.mxu0 0.0
        %1600 = vmatprep.subr.mxu0 0.0
        %1601 = vmatpush1.msra.mxu0 0.0
        %1602 = vmatprep.subr.mxu0 0.0
        %1603 = vmatpush1.msra.mxu0 0.0
        %1604 = vmatprep.subr.mxu0 0.0
        %1605 = vmatpush1.msra.mxu0 0.0
        %1606 = vmatprep.subr.mxu0 0.0
        %1607 = vmatpush1.msra.mxu0 0.0
        %1608 = vmatprep.subr.mxu0 0.0
        %1609 = vmatpush1.msra.mxu0 0.0
        %1610 = vmatprep.subr.mxu0 0.0
        %1611 = vmatpush1.msra.mxu0 0.0
        %1612 = vmatprep.subr.mxu0 0.0
        %1613 = vmatpush1.msra.mxu0 0.0
        %1614 = vmatprep.subr.mxu0 0.0
        %1615 = vmatpush1.msra.mxu0 0.0
        %1616 = vmatprep.subr.mxu0 0.0
        %1617 = vmatpush1.msra.mxu0 0.0
        %1618 = vmatprep.subr.mxu0 0.0
        %1619 = vmatpush1.msra.mxu0 0.0
        %1620 = vmatprep.subr.mxu0 0.0
        %1621 = vmatpush1.msra.mxu0 0.0
        %1622 = vmatprep.subr.mxu0 0.0
        %1623 = vmatpush1.msra.mxu0 0.0
        %1624 = vmatprep.subr.mxu0 0.0
        %1625 = vmatpush1.msra.mxu0 0.0
        %1626 = vmatprep.subr.mxu0 0.0
        %1627 = vmatpush1.msra.mxu0 0.0
        %1628 = vmatprep.mubr.f32.mxu0 0.0
        %1629 = vmatmul.mubr.f32.gmra.mrb[0].mxu0 %v1553
        %v1630 = vpop.f32.mrb[0].mxu0
        %v1631 = vadd.f32 %v1534, %v1630
        %v1632 = vpop.f32.mrb[0].mxu0
        %1633 = vmatprep.mubr.f32.mxu0 0.0
        %1634 = vmatmul.mubr.f32.gmra.mrb[0].mxu0 %v1556
        %v1635 = vpop.f32.mrb[0].mxu0
        %v1636 = vadd.f32 %v1539, %v1635
        %v1637 = vpop.f32.mrb[0].mxu0
        %1638 = vmatprep.mubr.f32.mxu0 0.0
        %1639 = vmatmul.mubr.f32.gmra.mrb[0].mxu0 %v1559
        %v1640 = vpop.f32.mrb[0].mxu0
        %v1641 = vadd.f32 %v1544, %v1640
        %v1642 = vpop.f32.mrb[0].mxu0
        %1643 = vmatprep.mubr.f32.mxu0 0.0
        %1644 = vmatmul.mubr.f32.gmra.mrb[0].mxu0 %v1562
        %v1645 = vpop.f32.mrb[0].mxu0
        %v1646 = vadd.f32 %v1549, %v1645
        %v1647 = vpop.f32.mrb[0].mxu0
        %1648 = vdwg.mxu0
        %v1649 = vmax.f32 %v1631, 0.0
        %v1650 = vmax.f32 %v1636, 0.0
        %v1651 = vmax.f32 %v1641, 0.0
        %v1652 = vmax.f32 %v1646, 0.0
        %v1653 = vld [vmem:[%s9] sm:$0xff]
        %v1654 = vld [vmem:[%s10] sm:$0xff]
        %1656 = vset.pattern.permute.xlu0 0
        %1657 = vperm.xlu0 %1656, %v1654
        %v1658 = vpop.permute.xlu0 %1657
        %v1661 = vsel %vm1551, %v1653, 0
        %1663 = vmatprep.subr.mxu0 0.0
        %1664 = vmatpush1.msra.mxu0 %v1649
        %1665 = vmatprep.subr.mxu0 0.0
        %1666 = vmatpush1.msra.mxu0 %v1650
        %1667 = vmatprep.subr.mxu0 0.0
        %1668 = vmatpush1.msra.mxu0 %v1651
        %1669 = vmatprep.subr.mxu0 0.0
        %1670 = vmatpush1.msra.mxu0 %v1652
        %1671 = vmatprep.subr.mxu0 0.0
        %1672 = vmatpush1.msra.mxu0 0.0
        %1673 = vmatprep.subr.mxu0 0.0
        %1674 = vmatpush1.msra.mxu0 0.0
        %1675 = vmatprep.subr.mxu0 0.0
        %1676 = vmatpush1.msra.mxu0 0.0
        %1677 = vmatprep.subr.mxu0 0.0
        %1678 = vmatpush1.msra.mxu0 0.0
        %1679 = vmatprep.subr.mxu0 0.0
        %1680 = vmatpush1.msra.mxu0 0.0
        %1681 = vmatprep.subr.mxu0 0.0
        %1682 = vmatpush1.msra.mxu0 0.0
        %1683 = vmatprep.subr.mxu0 0.0
        %1684 = vmatpush1.msra.mxu0 0.0
        %1685 = vmatprep.subr.mxu0 0.0
        %1686 = vmatpush1.msra.mxu0 0.0
        %1687 = vmatprep.subr.mxu0 0.0
        %1688 = vmatpush1.msra.mxu0 0.0
        %1689 = vmatprep.subr.mxu0 0.0
        %1690 = vmatpush1.msra.mxu0 0.0
        %1691 = vmatprep.subr.mxu0 0.0
        %1692 = vmatpush1.msra.mxu0 0.0
        %1693 = vmatprep.subr.mxu0 0.0
        %1694 = vmatpush1.msra.mxu0 0.0
        %1695 = vmatprep.subr.mxu0 0.0
        %1696 = vmatpush1.msra.mxu0 0.0
        %1697 = vmatprep.subr.mxu0 0.0
        %1698 = vmatpush1.msra.mxu0 0.0
        %1699 = vmatprep.subr.mxu0 0.0
        %1700 = vmatpush1.msra.mxu0 0.0
        %1701 = vmatprep.subr.mxu0 0.0
        %1702 = vmatpush1.msra.mxu0 0.0
        %1703 = vmatprep.subr.mxu0 0.0
        %1704 = vmatpush1.msra.mxu0 0.0
        %1705 = vmatprep.subr.mxu0 0.0
        %1706 = vmatpush1.msra.mxu0 0.0
        %1707 = vmatprep.subr.mxu0 0.0
        %1708 = vmatpush1.msra.mxu0 0.0
        %1709 = vmatprep.subr.mxu0 0.0
        %1710 = vmatpush1.msra.mxu0 0.0
        %1711 = vmatprep.subr.mxu0 0.0
        %1712 = vmatpush1.msra.mxu0 0.0
        %1713 = vmatprep.subr.mxu0 0.0
        %1714 = vmatpush1.msra.mxu0 0.0
        %1715 = vmatprep.subr.mxu0 0.0
        %1716 = vmatpush1.msra.mxu0 0.0
        %1717 = vmatprep.subr.mxu0 0.0
        %1718 = vmatpush1.msra.mxu0 0.0
        %1719 = vmatprep.subr.mxu0 0.0
        %1720 = vmatpush1.msra.mxu0 0.0
        %1721 = vmatprep.subr.mxu0 0.0
        %1722 = vmatpush1.msra.mxu0 0.0
        %1723 = vmatprep.subr.mxu0 0.0
        %1724 = vmatpush1.msra.mxu0 0.0
        %1725 = vmatprep.subr.mxu0 0.0
        %1726 = vmatpush1.msra.mxu0 0.0
        %1727 = vmatprep.mubr.f32.mxu0 0.0
        %1728 = vmatmul.mubr.f32.gmra.mrb[0].mxu0 %v1661
        %v1729 = vpop.f32.mrb[0].mxu0
        %v1730 = vadd.f32 %v1658, %v1729
        %v1731 = vpop.f32.mrb[0].mxu0
        %1732 = vdwg.mxu0
        %1733 = vst [vmem:[%s375] sm:$0xff] %v1730
        %s1734 = sand.u32 %s269, 1
        %s1735 = scalar_lea.sflag [#allocation3], %s1734
        %s1736 = sand.u32 %s269, 1
        %s1737 = smul.addr %s1736, 8
        %s1738 = scalar_lea.vmem [#allocation2], %s1737
        // Predicated region
        $region65: #{tpu_custom_call.1} parent=63 // pred_check
          %p1739 = pneg %p279
        $region66: #{tpu_custom_call.1} parent=63 // pred_check_branch
          %1741 = sbr.rel (%p1739) target = $region68
        $region67: #{tpu_custom_call.1} parent=63 // pred_region
          %s1743 = ssub.s32 128, 128
          %1744 = vsyncadd %s1735, %s1743
          %s1745 = smul.addr %s25, 128
          %s1746 = scalar_lea.hbm %s11, %s1745
          %s1748 = sshll.u32 %s1738, 4
          %s1749 = int_to_ptr.vmem [resolvable:$true] %s1748
          %1751 = dma.vmem_to_hbm [thread:$0]  %s1749, 128, %s1746, %s1735
        $region68: #{tpu_custom_call.1} parent=63 // pred_fallthru
          _
      $region64: #{tpu_custom_call.1} parent=5 // pred_fallthru
        _
      %p1752 = scmp.le.s32.totalorder 2, %s20
      // Predicated region
      $region69: #{tpu_custom_call.1} parent=5 // pred_check
        %p1753 = pneg %p1752
      $region70: #{tpu_custom_call.1} parent=5 // pred_check_branch
        %1755 = sbr.rel (%p1753) target = $region72
      $region71: #{tpu_custom_call.1} parent=5 // pred_region
        %s1756 = ssub.s32 %s20, 2
        // Predicated region
        $region73: #{tpu_custom_call.1} parent=71 // pred_check
          %p1757 = pneg %p285
        $region74: #{tpu_custom_call.1} parent=71 // pred_check_branch
          %1759 = sbr.rel (%p1757) target = $region76
        $region75: #{tpu_custom_call.1} parent=71 // pred_region
          %s1760 = sand.u32 %s270, 1
          %s1761 = scalar_lea.sflag [#allocation3], %s1760
          %s1762 = sand.u32 %s270, 1
          %s1763 = smul.addr %s1762, 8
          %s1764 = scalar_lea.vmem [#allocation2], %s1763
          %1765 = dma.done %s1761, 128
        $region76: #{tpu_custom_call.1} parent=71 // pred_fallthru
          _
      $region72: #{tpu_custom_call.1} parent=5 // pred_fallthru
        _
    $region6: #{tpu_custom_call.1} parent=1 // loop_footer
      %s24 = sadd.s32 1, %s20
    $region7: #{tpu_custom_call.1} parent=1 // loop_footer_branch
      %19 = sbr.rel target = $region3
    $region8: #{tpu_custom_call.1} parent=1 // loop_exit
      _
    %1766 = vsyncpa [#allocation3], 1
    %s1767 = scalar_lea.sflag [#allocation3], 1
    %1768 = vsyncpa %s1767, 1

</llo_original>
